<compile_context>
chip_gen: v7x
topology: tpu7x:2x2x1
jax: 0.10.0
libtpu: 0.0.40
codegen_flags: <defaults>
</compile_context>

<pallas_src>
import functools

import jax
import jax.numpy as jnp
from jax.experimental import pallas as pl
from jax.experimental.pallas import tpu as pltpu


def _round_up(x, m):
    return (x + m - 1) // m * m


# ---------------------------------------------------------------------------
# Pallas kernel: single-pass fused multi-source GEMM + BN bias
#                (+ residual) (+ ReLU).  No K grid axis, no scratch.
# ---------------------------------------------------------------------------
def _make_gemm_kernel(n_src, has_residual, apply_relu):
    def kernel(*refs):
        x_refs = refs[:n_src]
        w_refs = refs[n_src:2 * n_src]
        b_ref = refs[2 * n_src]
        r_ref = refs[2 * n_src + 1] if has_residual else None
        o_ref = refs[-1]

        acc = jnp.dot(x_refs[0][...], w_refs[0][...],
                      preferred_element_type=jnp.float32)
        for xr, wr in zip(x_refs[1:], w_refs[1:]):
            acc += jnp.dot(xr[...], wr[...],
                           preferred_element_type=jnp.float32)

        y = acc + b_ref[...]
        if has_residual:
            y = y + r_ref[...].astype(jnp.float32)
        if apply_relu:
            y = jnp.maximum(y, 0.0)
        o_ref[...] = y.astype(o_ref.dtype)

    return kernel


def _pick_tile_m(m, tile_m=256):
    """16-aligned M tile (bf16 sublane packing); when possible, split into
    >=2 tiles so both v7x TensorCores get work on the 'parallel' axis."""
    mr = _round_up(m, 16)
    tm = min(tile_m, mr)
    if mr // tm < 2 and mr >= 32:
        tm = _round_up((mr + 1) // 2, 16)
    mp = _round_up(m, tm)
    return tm, mp


def _fused_gemm(xs, ws, bias, residual=None, apply_relu=True, tile_m=256):
    """act(sum_s xs[s] @ ws[s] + bias [+ residual]) -> [M, C] bfloat16.

    xs[s]: [M, K_s] bf16; ws[s]: [K_s, C] bf16; bias: [1, C] f32;
    residual: [M, C] bf16 or None.  K and C blocks use the full array dims
    (no padded operand copies); only the rare M remainder is padded.
    """
    n_src = len(xs)
    M = xs[0].shape[0]
    C = ws[0].shape[1]
    tm, Mp = _pick_tile_m(M, tile_m)

    if Mp != M:
        xs = [jnp.pad(x, ((0, Mp - M), (0, 0))) for x in xs]
        if residual is not None:
            residual = jnp.pad(residual, ((0, Mp - M), (0, 0)))

    in_specs = []
    operands = []
    for x in xs:
        in_specs.append(pl.BlockSpec((tm, x.shape[1]), lambda i: (i, 0)))
        operands.append(x)
    for w in ws:
        in_specs.append(pl.BlockSpec((w.shape[0], C), lambda i: (0, 0)))
        operands.append(w)
    in_specs.append(pl.BlockSpec((1, C), lambda i: (0, 0)))
    operands.append(bias)
    if residual is not None:
        in_specs.append(pl.BlockSpec((tm, C), lambda i: (i, 0)))
        operands.append(residual)

    k_total = sum(int(x.shape[1]) for x in xs)
    bytes_accessed = (Mp * k_total * 2 + k_total * C * 2 + C * 4
                      + Mp * C * 2
                      + (Mp * C * 2 if residual is not None else 0))

    out = pl.pallas_call(
        _make_gemm_kernel(n_src, residual is not None, apply_relu),
        out_shape=jax.ShapeDtypeStruct((Mp, C), jnp.bfloat16),
        grid_spec=pltpu.PrefetchScalarGridSpec(
            num_scalar_prefetch=0,
            grid=(Mp // tm,),
            in_specs=in_specs,
            out_specs=pl.BlockSpec((tm, C), lambda i: (i, 0)),
        ),
        compiler_params=pltpu.CompilerParams(
            dimension_semantics=("parallel",),
            vmem_limit_bytes=32 * 1024 * 1024,
        ),
        cost_estimate=pl.CostEstimate(
            flops=2 * Mp * k_total * C,
            transcendentals=0,
            bytes_accessed=bytes_accessed,
        ),
    )(*operands)

    return out[:M] if Mp != M else out


# ---------------------------------------------------------------------------
# Conv2d + BN (+ residual) (+ ReLU) wrapper.  NHWC bf16 in / NHWC bf16 out.
# ---------------------------------------------------------------------------
def conv2d_bn_act(x_nhwc, weight, bn, *, stride=1, padding=0, dilation=1,
                  apply_relu=True, residual_nhwc=None, eps=1e-5):
    N, H, W, Cin = x_nhwc.shape
    Cout, Cin_w, kh, kw = weight.shape
    assert Cin == Cin_w
    gamma, beta, mean, var = bn

    Ho = (H + 2 * padding - dilation * (kh - 1) - 1) // stride + 1
    Wo = (W + 2 * padding - dilation * (kw - 1) - 1) // stride + 1
    M = N * Ho * Wo

    if kh == 1 and kw == 1 and stride == 1 and padding == 0:
        patches = x_nhwc.reshape(M, Cin)          # free reshape, no copy
    else:
        # TODO(synk): in-kernel direct conv over the 9 taps (no im2col copy).
        xp = jnp.pad(x_nhwc,
                     ((0, 0), (padding, padding), (padding, padding), (0, 0)))
        taps = []
        for a in range(kh):
            for b in range(kw):
                taps.append(
                    xp[:,
                       a * dilation: a * dilation + (Ho - 1) * stride + 1: stride,
                       b * dilation: b * dilation + (Wo - 1) * stride + 1: stride,
                       :])
        patches = jnp.stack(taps, axis=3).reshape(M, kh * kw * Cin)

    # Fold eval-mode BN scale into the (static) weights; shift -> GEMM bias.
    scale = gamma / jnp.sqrt(var + eps)
    bias = (beta - mean * scale).astype(jnp.float32).reshape(1, Cout)
    w_mat = jnp.transpose(weight, (2, 3, 1, 0)).reshape(kh * kw * Cin, Cout)
    w_mat = (w_mat * scale[None, :]).astype(jnp.bfloat16)

    res = None
    if residual_nhwc is not None:
        res = residual_nhwc.reshape(M, Cout)

    y = _fused_gemm([patches], [w_mat], bias, residual=res,
                    apply_relu=apply_relu)
    return y.reshape(N, Ho, Wo, Cout)


def root_conv_bn_relu(p, sources, residual_nhwc=None, eps=1e-5):
    """Root: 1x1 conv over channel-concat of `sources` + BN [+res] + ReLU,
    done as a K-split multi-source GEMM (no concat materialized in HBM)."""
    N, Ho, Wo, _ = sources[0].shape
    M = N * Ho * Wo
    w = p["conv_w"]                       # (Cout, root_dim, 1, 1)
    gamma, beta, mean, var = p["bn"]
    Cout = w.shape[0]

    scale = gamma / jnp.sqrt(var + eps)
    bias = (beta - mean * scale).astype(jnp.float32).reshape(1, Cout)
    w_full = w[:, :, 0, 0].T * scale[None, :]          # (root_dim, Cout) f32

    xs, ws, off = [], [], 0
    for s in sources:
        C = s.shape[-1]
        xs.append(s.reshape(M, C))
        ws.append(w_full[off:off + C, :].astype(jnp.bfloat16))
        off += C

    res = residual_nhwc.reshape(M, Cout) if residual_nhwc is not None else None
    y = _fused_gemm(xs, ws, bias, residual=res, apply_relu=True)
    return y.reshape(N, Ho, Wo, Cout)


def max_pool2d_nhwc(x, k):
    # nn.MaxPool2d(k, stride=k): floor mode, no padding.
    N, H, W, C = x.shape
    Hc, Wc = (H // k) * k, (W // k) * k
    x = x[:, :Hc, :Wc, :].reshape(N, Hc // k, k, Wc // k, k, C)
    return jnp.max(x, axis=(2, 4))


# ---------------------------------------------------------------------------
# Tree forward (levels=1, block = DLA BasicBlock, as used by DSFNet).
# ---------------------------------------------------------------------------
def basic_block_forward(p, x, residual, *, stride=1, dilation=1):
    out = conv2d_bn_act(x, p["conv1_w"], p["bn1"], stride=stride,
                        padding=dilation, dilation=dilation, apply_relu=True)
    out = conv2d_bn_act(out, p["conv2_w"], p["bn2"], stride=1,
                        padding=dilation, dilation=dilation, apply_relu=True,
                        residual_nhwc=residual)
    return out


def tree_forward(params, x_nchw, *, stride=2, level_root=True,
                 root_residual=False):
    # Layout conversion only at entry/exit; bf16 NHWC everywhere inside.
    x = jnp.transpose(x_nchw, (0, 2, 3, 1)).astype(jnp.bfloat16)

    children = []
    bottom = max_pool2d_nhwc(x, stride) if stride > 1 else x
    if "project" in params:
        residual = conv2d_bn_act(bottom, params["project"]["conv_w"],
                                 params["project"]["bn"], stride=1, padding=0,
                                 apply_relu=False)
    else:
        residual = bottom
    if level_root:
        children.append(bottom)

    x1 = basic_block_forward(params["tree1"], x, residual, stride=stride)
    x2 = basic_block_forward(params["tree2"], x1, x1, stride=1)

    # Root: conv1x1(cat(x2, x1, *children)) + BN [+ x2] + ReLU, concat-free.
    out = root_conv_bn_relu(params["root"], [x2, x1] + children,
                            residual_nhwc=x2 if root_residual else None)
    return jnp.transpose(out.astype(jnp.float32), (0, 3, 1, 2))


# ---------------------------------------------------------------------------
# Parameter construction + pure-JAX f32 reference + self-test.
# ---------------------------------------------------------------------------
def _bn_params(key, c):
    k1, k2, k3, k4 = jax.random.split(key, 4)
    gamma = 1.0 + 0.1 * jax.random.normal(k1, (c,), jnp.float32)
    beta = 0.1 * jax.random.normal(k2, (c,), jnp.float32)
    mean = 0.1 * jax.random.normal(k3, (c,), jnp.float32)
    var = jnp.abs(1.0 + 0.1 * jax.random.normal(k4, (c,), jnp.float32))
    return (gamma, beta, mean, var)


def _conv_w(key, cout, cin, k):
    fan_in = cin * k * k
    return (jax.random.normal(key, (cout, cin, k, k), jnp.float32)
            * jnp.sqrt(2.0 / fan_in))


def init_tree_params(key, in_ch, out_ch, *, level_root=True):
    root_dim = 2 * out_ch + (in_ch if level_root else 0)
    ks = jax.random.split(key, 12)
    params = {
        "tree1": {"conv1_w": _conv_w(ks[0], out_ch, in_ch, 3),
                  "bn1": _bn_params(ks[1], out_ch),
                  "conv2_w": _conv_w(ks[2], out_ch, out_ch, 3),
                  "bn2": _bn_params(ks[3], out_ch)},
        "tree2": {"conv1_w": _conv_w(ks[4], out_ch, out_ch, 3),
                  "bn1": _bn_params(ks[5], out_ch),
                  "conv2_w": _conv_w(ks[6], out_ch, out_ch, 3),
                  "bn2": _bn_params(ks[7], out_ch)},
        "root": {"conv_w": _conv_w(ks[8], out_ch, root_dim, 1),
                 "bn": _bn_params(ks[9], out_ch)},
    }
    if in_ch != out_ch:
        params["project"] = {"conv_w": _conv_w(ks[10], out_ch, in_ch, 1),
                             "bn": _bn_params(ks[11], out_ch)}
    return params


def _ref_max_pool_nchw(x, k):
    N, C, H, W = x.shape
    Hc, Wc = (H // k) * k, (W // k) * k
    x = x[:, :, :Hc, :Wc].reshape(N, C, Hc // k, k, Wc // k, k)
    return jnp.max(x, axis=(3, 5))


def _ref_conv_bn(x, w, bn, stride, padding, relu, residual=None,
                 dilation=1, eps=1e-5):
    y = jax.lax.conv_general_dilated(
        x, w, (stride, stride), [(padding, padding)] * 2,
        rhs_dilation=(dilation, dilation),
        dimension_numbers=("NCHW", "OIHW", "NCHW"),
        precision=jax.lax.Precision.HIGHEST)
    gamma, beta, mean, var = bn
    scale = (gamma / jnp.sqrt(var + eps)).reshape(1, -1, 1, 1)
    shift = (beta - mean * gamma / jnp.sqrt(var + eps)).reshape(1, -1, 1, 1)
    y = y * scale + shift
    if residual is not None:
        y = y + residual
    if relu:
        y = jnp.maximum(y, 0.0)
    return y


def _ref_basic_block(p, x, residual, stride):
    out = _ref_conv_bn(x, p["conv1_w"], p["bn1"], stride, 1, True)
    out = _ref_conv_bn(out, p["conv2_w"], p["bn2"], 1, 1, True,
                       residual=residual)
    return out


def tree_reference(params, x, *, stride=2, level_root=True,
                   root_residual=False):
    children = []
    bottom = _ref_max_pool_nchw(x, stride) if stride > 1 else x
    residual = (_ref_conv_bn(bottom, params["project"]["conv_w"],
                             params["project"]["bn"], 1, 0, False)
                if "project" in params else bottom)
    if level_root:
        children.append(bottom)
    x1 = _ref_basic_block(params["tree1"], x, residual, stride)
    x2 = _ref_basic_block(params["tree2"], x1, x1, 1)
    cat = jnp.concatenate([x2, x1] + children, axis=1)
    return _ref_conv_bn(cat, params["root"]["conv_w"], params["root"]["bn"],
                        1, 0, True, residual=x2 if root_residual else None)


if __name__ == "__main__":
    key = jax.random.PRNGKey(0)
    kp, kx = jax.random.split(key)

    # Tree(levels=1, block=BasicBlock, 16 -> 32, stride=2, level_root=True)
    N, Cin, H, W = 2, 16, 16, 16
    Cout, stride = 32, 2

    params = init_tree_params(kp, Cin, Cout, level_root=True)
    x = jax.random.normal(kx, (N, Cin, H, W), jnp.float32)

    fwd = jax.jit(functools.partial(tree_forward, stride=stride,
                                    level_root=True, root_residual=False))
    out = jax.block_until_ready(fwd(params, x))

    ref = jax.block_until_ready(
        tree_reference(params, x, stride=stride, level_root=True,
                       root_residual=False))

    assert out.shape == (N, Cout, H // stride, W // stride), out.shape
    err = float(jnp.max(jnp.abs(out - ref)))
    denom = float(jnp.max(jnp.abs(ref))) + 1e-6
    assert err / denom < 2e-2, f"relative error too large: {err / denom:.5f}"

    print("KERNEL_OK")
</pallas_src>

<mosaic_0001>
module attributes {stable_mosaic.version = 11 : i64} {
  func.func @kernel(%arg0: i32, %arg1: memref<64x144xbf16, #tpu.memory_space<vmem>>, %arg2: memref<144x32xbf16, #tpu.memory_space<vmem>>, %arg3: memref<1x32xf32, #tpu.memory_space<vmem>>, %arg4: memref<64x32xbf16, #tpu.memory_space<vmem>>) attributes {dimension_semantics = [#tpu.dimension_semantics<parallel>], iteration_bounds = array<i64: 2>, scalar_prefetch = 0 : i64, scratch_operands = 0 : i64, tpu.core_type = #tpu.core_type<tc>, window_params = [{transform_indices = @transform_0, window_bounds = array<i64: 64, 144>}, {pipeline_mode = #tpu.pipeline_mode<synchronous>, transform_indices = @transform_1, window_bounds = array<i64: 144, 32>}, {pipeline_mode = #tpu.pipeline_mode<synchronous>, transform_indices = @transform_2, window_bounds = array<i64: 1, 32>}, {transform_indices = @transform_3, window_bounds = array<i64: 64, 32>}]} {
    %c0 = arith.constant 0 : index
    %c0_0 = arith.constant 0 : index
    %0 = vector.load %arg1[%c0, %c0_0] : memref<64x144xbf16, #tpu.memory_space<vmem>>, vector<64x144xbf16>
    %c0_1 = arith.constant 0 : index
    %c0_2 = arith.constant 0 : index
    %1 = vector.load %arg2[%c0_1, %c0_2] : memref<144x32xbf16, #tpu.memory_space<vmem>>, vector<144x32xbf16>
    %cst = arith.constant dense<0.000000e+00> : vector<64x32xf32>
    %2 = tpu.matmul %0, %1, %cst {dimension_numbers = #tpu.dot_dimension_numbers<[1], [0], [0], [1], [0, 0, 1, 1], [], []>} : vector<64x144xbf16>, vector<144x32xbf16>, vector<64x32xf32> -> vector<64x32xf32>
    %c0_3 = arith.constant 0 : index
    %c0_4 = arith.constant 0 : index
    %3 = vector.load %arg3[%c0_3, %c0_4] : memref<1x32xf32, #tpu.memory_space<vmem>>, vector<1x32xf32>
    %4 = vector.broadcast %3 : vector<1x32xf32> to vector<64x32xf32>
    %5 = arith.addf %2, %4 : vector<64x32xf32>
    %cst_5 = arith.constant 0.000000e+00 : f32
    %6 = vector.broadcast %cst_5 : f32 to vector<64x32xf32>
    %7 = arith.maximumf %5, %6 : vector<64x32xf32>
    %8 = arith.truncf %7 : vector<64x32xf32> to vector<64x32xbf16>
    %c0_6 = arith.constant 0 : index
    %c0_7 = arith.constant 0 : index
    %9 = vector.load %arg4[%c0_6, %c0_7] : memref<64x32xbf16, #tpu.memory_space<vmem>>, vector<64x32xbf16>
    tpu.vector_store %arg4[%c0_6, %c0_7], %8 {strides = array<i32>} : memref<64x32xbf16, #tpu.memory_space<vmem>>, vector<64x32xbf16>,
    return
  }
  func.func @transform_0(%arg0: i32) -> (i32, i32) {
    %c0_i32 = arith.constant 0 : i32
    %c0_i32_0 = arith.constant 0 : i32
    return %arg0, %c0_i32 : i32, i32
  }
  func.func @transform_1(%arg0: i32) -> (i32, i32) {
    %c0_i32 = arith.constant 0 : i32
    %c0_i32_0 = arith.constant 0 : i32
    %c0_i32_1 = arith.constant 0 : i32
    return %c0_i32, %c0_i32_0 : i32, i32
  }
  func.func @transform_2(%arg0: i32) -> (i32, i32) {
    %c0_i32 = arith.constant 0 : i32
    %c0_i32_0 = arith.constant 0 : i32
    %c0_i32_1 = arith.constant 0 : i32
    return %c0_i32, %c0_i32_0 : i32, i32
  }
  func.func @transform_3(%arg0: i32) -> (i32, i32) {
    %c0_i32 = arith.constant 0 : i32
    %c0_i32_0 = arith.constant 0 : i32
    return %arg0, %c0_i32 : i32, i32
  }
}

module attributes {stable_mosaic.version = 11 : i64} {
  func.func @kernel(%arg0: i32, %arg1: memref<64x16xbf16, #tpu.memory_space<vmem>>, %arg2: memref<16x32xbf16, #tpu.memory_space<vmem>>, %arg3: memref<1x32xf32, #tpu.memory_space<vmem>>, %arg4: memref<64x32xbf16, #tpu.memory_space<vmem>>) attributes {dimension_semantics = [#tpu.dimension_semantics<parallel>], iteration_bounds = array<i64: 2>, scalar_prefetch = 0 : i64, scratch_operands = 0 : i64, tpu.core_type = #tpu.core_type<tc>, window_params = [{transform_indices = @transform_0, window_bounds = array<i64: 64, 16>}, {pipeline_mode = #tpu.pipeline_mode<synchronous>, transform_indices = @transform_1, window_bounds = array<i64: 16, 32>}, {pipeline_mode = #tpu.pipeline_mode<synchronous>, transform_indices = @transform_2, window_bounds = array<i64: 1, 32>}, {transform_indices = @transform_3, window_bounds = array<i64: 64, 32>}]} {
    %c0 = arith.constant 0 : index
    %c0_0 = arith.constant 0 : index
    %0 = vector.load %arg1[%c0, %c0_0] : memref<64x16xbf16, #tpu.memory_space<vmem>>, vector<64x16xbf16>
    %c0_1 = arith.constant 0 : index
    %c0_2 = arith.constant 0 : index
    %1 = vector.load %arg2[%c0_1, %c0_2] : memref<16x32xbf16, #tpu.memory_space<vmem>>, vector<16x32xbf16>
    %cst = arith.constant dense<0.000000e+00> : vector<64x32xf32>
    %2 = tpu.matmul %0, %1, %cst {dimension_numbers = #tpu.dot_dimension_numbers<[1], [0], [0], [1], [0, 0, 1, 1], [], []>} : vector<64x16xbf16>, vector<16x32xbf16>, vector<64x32xf32> -> vector<64x32xf32>
    %c0_3 = arith.constant 0 : index
    %c0_4 = arith.constant 0 : index
    %3 = vector.load %arg3[%c0_3, %c0_4] : memref<1x32xf32, #tpu.memory_space<vmem>>, vector<1x32xf32>
    %4 = vector.broadcast %3 : vector<1x32xf32> to vector<64x32xf32>
    %5 = arith.addf %2, %4 : vector<64x32xf32>
    %6 = arith.truncf %5 : vector<64x32xf32> to vector<64x32xbf16>
    %c0_5 = arith.constant 0 : index
    %c0_6 = arith.constant 0 : index
    %7 = vector.load %arg4[%c0_5, %c0_6] : memref<64x32xbf16, #tpu.memory_space<vmem>>, vector<64x32xbf16>
    tpu.vector_store %arg4[%c0_5, %c0_6], %6 {strides = array<i32>} : memref<64x32xbf16, #tpu.memory_space<vmem>>, vector<64x32xbf16>,
    return
  }
  func.func @transform_0(%arg0: i32) -> (i32, i32) {
    %c0_i32 = arith.constant 0 : i32
    %c0_i32_0 = arith.constant 0 : i32
    return %arg0, %c0_i32 : i32, i32
  }
  func.func @transform_1(%arg0: i32) -> (i32, i32) {
    %c0_i32 = arith.constant 0 : i32
    %c0_i32_0 = arith.constant 0 : i32
    %c0_i32_1 = arith.constant 0 : i32
    return %c0_i32, %c0_i32_0 : i32, i32
  }
  func.func @transform_2(%arg0: i32) -> (i32, i32) {
    %c0_i32 = arith.constant 0 : i32
    %c0_i32_0 = arith.constant 0 : i32
    %c0_i32_1 = arith.constant 0 : i32
    return %c0_i32, %c0_i32_0 : i32, i32
  }
  func.func @transform_3(%arg0: i32) -> (i32, i32) {
    %c0_i32 = arith.constant 0 : i32
    %c0_i32_0 = arith.constant 0 : i32
    return %arg0, %c0_i32 : i32, i32
  }
}

module attributes {stable_mosaic.version = 11 : i64} {
  func.func @kernel(%arg0: i32, %arg1: memref<64x288xbf16, #tpu.memory_space<vmem>>, %arg2: memref<288x32xbf16, #tpu.memory_space<vmem>>, %arg3: memref<1x32xf32, #tpu.memory_space<vmem>>, %arg4: memref<64x32xbf16, #tpu.memory_space<vmem>>, %arg5: memref<64x32xbf16, #tpu.memory_space<vmem>>) attributes {dimension_semantics = [#tpu.dimension_semantics<parallel>], iteration_bounds = array<i64: 2>, scalar_prefetch = 0 : i64, scratch_operands = 0 : i64, tpu.core_type = #tpu.core_type<tc>, window_params = [{transform_indices = @transform_0, window_bounds = array<i64: 64, 288>}, {pipeline_mode = #tpu.pipeline_mode<synchronous>, transform_indices = @transform_1, window_bounds = array<i64: 288, 32>}, {pipeline_mode = #tpu.pipeline_mode<synchronous>, transform_indices = @transform_2, window_bounds = array<i64: 1, 32>}, {transform_indices = @transform_3, window_bounds = array<i64: 64, 32>}, {transform_indices = @transform_4, window_bounds = array<i64: 64, 32>}]} {
    %c0 = arith.constant 0 : index
    %c0_0 = arith.constant 0 : index
    %0 = vector.load %arg1[%c0, %c0_0] : memref<64x288xbf16, #tpu.memory_space<vmem>>, vector<64x288xbf16>
    %c0_1 = arith.constant 0 : index
    %c0_2 = arith.constant 0 : index
    %1 = vector.load %arg2[%c0_1, %c0_2] : memref<288x32xbf16, #tpu.memory_space<vmem>>, vector<288x32xbf16>
    %cst = arith.constant dense<0.000000e+00> : vector<64x32xf32>
    %2 = tpu.matmul %0, %1, %cst {dimension_numbers = #tpu.dot_dimension_numbers<[1], [0], [0], [1], [0, 0, 1, 1], [], []>} : vector<64x288xbf16>, vector<288x32xbf16>, vector<64x32xf32> -> vector<64x32xf32>
    %c0_3 = arith.constant 0 : index
    %c0_4 = arith.constant 0 : index
    %3 = vector.load %arg3[%c0_3, %c0_4] : memref<1x32xf32, #tpu.memory_space<vmem>>, vector<1x32xf32>
    %4 = vector.broadcast %3 : vector<1x32xf32> to vector<64x32xf32>
    %5 = arith.addf %2, %4 : vector<64x32xf32>
    %c0_5 = arith.constant 0 : index
    %c0_6 = arith.constant 0 : index
    %6 = vector.load %arg4[%c0_5, %c0_6] : memref<64x32xbf16, #tpu.memory_space<vmem>>, vector<64x32xbf16>
    %7 = arith.extf %6 : vector<64x32xbf16> to vector<64x32xf32>
    %8 = arith.addf %5, %7 : vector<64x32xf32>
    %cst_7 = arith.constant 0.000000e+00 : f32
    %9 = vector.broadcast %cst_7 : f32 to vector<64x32xf32>
    %10 = arith.maximumf %8, %9 : vector<64x32xf32>
    %11 = arith.truncf %10 : vector<64x32xf32> to vector<64x32xbf16>
    %c0_8 = arith.constant 0 : index
    %c0_9 = arith.constant 0 : index
    %12 = vector.load %arg5[%c0_8, %c0_9] : memref<64x32xbf16, #tpu.memory_space<vmem>>, vector<64x32xbf16>
    tpu.vector_store %arg5[%c0_8, %c0_9], %11 {strides = array<i32>} : memref<64x32xbf16, #tpu.memory_space<vmem>>, vector<64x32xbf16>,
    return
  }
  func.func @transform_0(%arg0: i32) -> (i32, i32) {
    %c0_i32 = arith.constant 0 : i32
    %c0_i32_0 = arith.constant 0 : i32
    return %arg0, %c0_i32 : i32, i32
  }
  func.func @transform_1(%arg0: i32) -> (i32, i32) {
    %c0_i32 = arith.constant 0 : i32
    %c0_i32_0 = arith.constant 0 : i32
    %c0_i32_1 = arith.constant 0 : i32
    return %c0_i32, %c0_i32_0 : i32, i32
  }
  func.func @transform_2(%arg0: i32) -> (i32, i32) {
    %c0_i32 = arith.constant 0 : i32
    %c0_i32_0 = arith.constant 0 : i32
    %c0_i32_1 = arith.constant 0 : i32
    return %c0_i32, %c0_i32_0 : i32, i32
  }
  func.func @transform_3(%arg0: i32) -> (i32, i32) {
    %c0_i32 = arith.constant 0 : i32
    %c0_i32_0 = arith.constant 0 : i32
    return %arg0, %c0_i32 : i32, i32
  }
  func.func @transform_4(%arg0: i32) -> (i32, i32) {
    %c0_i32 = arith.constant 0 : i32
    %c0_i32_0 = arith.constant 0 : i32
    return %arg0, %c0_i32 : i32, i32
  }
}

module attributes {stable_mosaic.version = 11 : i64} {
  func.func @kernel(%arg0: i32, %arg1: memref<64x288xbf16, #tpu.memory_space<vmem>>, %arg2: memref<288x32xbf16, #tpu.memory_space<vmem>>, %arg3: memref<1x32xf32, #tpu.memory_space<vmem>>, %arg4: memref<64x32xbf16, #tpu.memory_space<vmem>>) attributes {dimension_semantics = [#tpu.dimension_semantics<parallel>], iteration_bounds = array<i64: 2>, scalar_prefetch = 0 : i64, scratch_operands = 0 : i64, tpu.core_type = #tpu.core_type<tc>, window_params = [{transform_indices = @transform_0, window_bounds = array<i64: 64, 288>}, {pipeline_mode = #tpu.pipeline_mode<synchronous>, transform_indices = @transform_1, window_bounds = array<i64: 288, 32>}, {pipeline_mode = #tpu.pipeline_mode<synchronous>, transform_indices = @transform_2, window_bounds = array<i64: 1, 32>}, {transform_indices = @transform_3, window_bounds = array<i64: 64, 32>}]} {
    %c0 = arith.constant 0 : index
    %c0_0 = arith.constant 0 : index
    %0 = vector.load %arg1[%c0, %c0_0] : memref<64x288xbf16, #tpu.memory_space<vmem>>, vector<64x288xbf16>
    %c0_1 = arith.constant 0 : index
    %c0_2 = arith.constant 0 : index
    %1 = vector.load %arg2[%c0_1, %c0_2] : memref<288x32xbf16, #tpu.memory_space<vmem>>, vector<288x32xbf16>
    %cst = arith.constant dense<0.000000e+00> : vector<64x32xf32>
    %2 = tpu.matmul %0, %1, %cst {dimension_numbers = #tpu.dot_dimension_numbers<[1], [0], [0], [1], [0, 0, 1, 1], [], []>} : vector<64x288xbf16>, vector<288x32xbf16>, vector<64x32xf32> -> vector<64x32xf32>
    %c0_3 = arith.constant 0 : index
    %c0_4 = arith.constant 0 : index
    %3 = vector.load %arg3[%c0_3, %c0_4] : memref<1x32xf32, #tpu.memory_space<vmem>>, vector<1x32xf32>
    %4 = vector.broadcast %3 : vector<1x32xf32> to vector<64x32xf32>
    %5 = arith.addf %2, %4 : vector<64x32xf32>
    %cst_5 = arith.constant 0.000000e+00 : f32
    %6 = vector.broadcast %cst_5 : f32 to vector<64x32xf32>
    %7 = arith.maximumf %5, %6 : vector<64x32xf32>
    %8 = arith.truncf %7 : vector<64x32xf32> to vector<64x32xbf16>
    %c0_6 = arith.constant 0 : index
    %c0_7 = arith.constant 0 : index
    %9 = vector.load %arg4[%c0_6, %c0_7] : memref<64x32xbf16, #tpu.memory_space<vmem>>, vector<64x32xbf16>
    tpu.vector_store %arg4[%c0_6, %c0_7], %8 {strides = array<i32>} : memref<64x32xbf16, #tpu.memory_space<vmem>>, vector<64x32xbf16>,
    return
  }
  func.func @transform_0(%arg0: i32) -> (i32, i32) {
    %c0_i32 = arith.constant 0 : i32
    %c0_i32_0 = arith.constant 0 : i32
    return %arg0, %c0_i32 : i32, i32
  }
  func.func @transform_1(%arg0: i32) -> (i32, i32) {
    %c0_i32 = arith.constant 0 : i32
    %c0_i32_0 = arith.constant 0 : i32
    %c0_i32_1 = arith.constant 0 : i32
    return %c0_i32, %c0_i32_0 : i32, i32
  }
  func.func @transform_2(%arg0: i32) -> (i32, i32) {
    %c0_i32 = arith.constant 0 : i32
    %c0_i32_0 = arith.constant 0 : i32
    %c0_i32_1 = arith.constant 0 : i32
    return %c0_i32, %c0_i32_0 : i32, i32
  }
  func.func @transform_3(%arg0: i32) -> (i32, i32) {
    %c0_i32 = arith.constant 0 : i32
    %c0_i32_0 = arith.constant 0 : i32
    return %arg0, %c0_i32 : i32, i32
  }
}

module attributes {stable_mosaic.version = 11 : i64} {
  func.func @kernel(%arg0: i32, %arg1: memref<64x32xbf16, #tpu.memory_space<vmem>>, %arg2: memref<64x32xbf16, #tpu.memory_space<vmem>>, %arg3: memref<64x16xbf16, #tpu.memory_space<vmem>>, %arg4: memref<32x32xbf16, #tpu.memory_space<vmem>>, %arg5: memref<32x32xbf16, #tpu.memory_space<vmem>>, %arg6: memref<16x32xbf16, #tpu.memory_space<vmem>>, %arg7: memref<1x32xf32, #tpu.memory_space<vmem>>, %arg8: memref<64x32xbf16, #tpu.memory_space<vmem>>) attributes {dimension_semantics = [#tpu.dimension_semantics<parallel>], iteration_bounds = array<i64: 2>, scalar_prefetch = 0 : i64, scratch_operands = 0 : i64, tpu.core_type = #tpu.core_type<tc>, window_params = [{transform_indices = @transform_0, window_bounds = array<i64: 64, 32>}, {transform_indices = @transform_1, window_bounds = array<i64: 64, 32>}, {transform_indices = @transform_2, window_bounds = array<i64: 64, 16>}, {pipeline_mode = #tpu.pipeline_mode<synchronous>, transform_indices = @transform_3, window_bounds = array<i64: 32, 32>}, {pipeline_mode = #tpu.pipeline_mode<synchronous>, transform_indices = @transform_4, window_bounds = array<i64: 32, 32>}, {pipeline_mode = #tpu.pipeline_mode<synchronous>, transform_indices = @transform_5, window_bounds = array<i64: 16, 32>}, {pipeline_mode = #tpu.pipeline_mode<synchronous>, transform_indices = @transform_6, window_bounds = array<i64: 1, 32>}, {transform_indices = @transform_7, window_bounds = array<i64: 64, 32>}]} {
    %c0 = arith.constant 0 : index
    %c0_0 = arith.constant 0 : index
    %0 = vector.load %arg1[%c0, %c0_0] : memref<64x32xbf16, #tpu.memory_space<vmem>>, vector<64x32xbf16>
    %c0_1 = arith.constant 0 : index
    %c0_2 = arith.constant 0 : index
    %1 = vector.load %arg4[%c0_1, %c0_2] : memref<32x32xbf16, #tpu.memory_space<vmem>>, vector<32x32xbf16>
    %cst = arith.constant dense<0.000000e+00> : vector<64x32xf32>
    %2 = tpu.matmul %0, %1, %cst {dimension_numbers = #tpu.dot_dimension_numbers<[1], [0], [0], [1], [0, 0, 1, 1], [], []>} : vector<64x32xbf16>, vector<32x32xbf16>, vector<64x32xf32> -> vector<64x32xf32>
    %c0_3 = arith.constant 0 : index
    %c0_4 = arith.constant 0 : index
    %3 = vector.load %arg2[%c0_3, %c0_4] : memref<64x32xbf16, #tpu.memory_space<vmem>>, vector<64x32xbf16>
    %c0_5 = arith.constant 0 : index
    %c0_6 = arith.constant 0 : index
    %4 = vector.load %arg5[%c0_5, %c0_6] : memref<32x32xbf16, #tpu.memory_space<vmem>>, vector<32x32xbf16>
    %cst_7 = arith.constant dense<0.000000e+00> : vector<64x32xf32>
    %5 = tpu.matmul %3, %4, %cst_7 {dimension_numbers = #tpu.dot_dimension_numbers<[1], [0], [0], [1], [0, 0, 1, 1], [], []>} : vector<64x32xbf16>, vector<32x32xbf16>, vector<64x32xf32> -> vector<64x32xf32>
    %6 = arith.addf %2, %5 : vector<64x32xf32>
    %c0_8 = arith.constant 0 : index
    %c0_9 = arith.constant 0 : index
    %7 = vector.load %arg3[%c0_8, %c0_9] : memref<64x16xbf16, #tpu.memory_space<vmem>>, vector<64x16xbf16>
    %c0_10 = arith.constant 0 : index
    %c0_11 = arith.constant 0 : index
    %8 = vector.load %arg6[%c0_10, %c0_11] : memref<16x32xbf16, #tpu.memory_space<vmem>>, vector<16x32xbf16>
    %cst_12 = arith.constant dense<0.000000e+00> : vector<64x32xf32>
    %9 = tpu.matmul %7, %8, %cst_12 {dimension_numbers = #tpu.dot_dimension_numbers<[1], [0], [0], [1], [0, 0, 1, 1], [], []>} : vector<64x16xbf16>, vector<16x32xbf16>, vector<64x32xf32> -> vector<64x32xf32>
    %10 = arith.addf %6, %9 : vector<64x32xf32>
    %c0_13 = arith.constant 0 : index
    %c0_14 = arith.constant 0 : index
    %11 = vector.load %arg7[%c0_13, %c0_14] : memref<1x32xf32, #tpu.memory_space<vmem>>, vector<1x32xf32>
    %12 = vector.broadcast %11 : vector<1x32xf32> to vector<64x32xf32>
    %13 = arith.addf %10, %12 : vector<64x32xf32>
    %cst_15 = arith.constant 0.000000e+00 : f32
    %14 = vector.broadcast %cst_15 : f32 to vector<64x32xf32>
    %15 = arith.maximumf %13, %14 : vector<64x32xf32>
    %16 = arith.truncf %15 : vector<64x32xf32> to vector<64x32xbf16>
    %c0_16 = arith.constant 0 : index
    %c0_17 = arith.constant 0 : index
    %17 = vector.load %arg8[%c0_16, %c0_17] : memref<64x32xbf16, #tpu.memory_space<vmem>>, vector<64x32xbf16>
    tpu.vector_store %arg8[%c0_16, %c0_17], %16 {strides = array<i32>} : memref<64x32xbf16, #tpu.memory_space<vmem>>, vector<64x32xbf16>,
    return
  }
  func.func @transform_0(%arg0: i32) -> (i32, i32) {
    %c0_i32 = arith.constant 0 : i32
    %c0_i32_0 = arith.constant 0 : i32
    return %arg0, %c0_i32 : i32, i32
  }
  func.func @transform_1(%arg0: i32) -> (i32, i32) {
    %c0_i32 = arith.constant 0 : i32
    %c0_i32_0 = arith.constant 0 : i32
    return %arg0, %c0_i32 : i32, i32
  }
  func.func @transform_2(%arg0: i32) -> (i32, i32) {
    %c0_i32 = arith.constant 0 : i32
    %c0_i32_0 = arith.constant 0 : i32
    return %arg0, %c0_i32 : i32, i32
  }
  func.func @transform_3(%arg0: i32) -> (i32, i32) {
    %c0_i32 = arith.constant 0 : i32
    %c0_i32_0 = arith.constant 0 : i32
    %c0_i32_1 = arith.constant 0 : i32
    return %c0_i32, %c0_i32_0 : i32, i32
  }
  func.func @transform_4(%arg0: i32) -> (i32, i32) {
    %c0_i32 = arith.constant 0 : i32
    %c0_i32_0 = arith.constant 0 : i32
    %c0_i32_1 = arith.constant 0 : i32
    return %c0_i32, %c0_i32_0 : i32, i32
  }
  func.func @transform_5(%arg0: i32) -> (i32, i32) {
    %c0_i32 = arith.constant 0 : i32
    %c0_i32_0 = arith.constant 0 : i32
    %c0_i32_1 = arith.constant 0 : i32
    return %c0_i32, %c0_i32_0 : i32, i32
  }
  func.func @transform_6(%arg0: i32) -> (i32, i32) {
    %c0_i32 = arith.constant 0 : i32
    %c0_i32_0 = arith.constant 0 : i32
    %c0_i32_1 = arith.constant 0 : i32
    return %c0_i32, %c0_i32_0 : i32, i32
  }
  func.func @transform_7(%arg0: i32) -> (i32, i32) {
    %c0_i32 = arith.constant 0 : i32
    %c0_i32_0 = arith.constant 0 : i32
    return %arg0, %c0_i32 : i32, i32
  }
}

</mosaic_0001>

<llo_original>
// kernel: tree_forward.7
$region0: #{tree_forward.7}
  #allocation0 [shape = 'u32[]', space=smem, size = 0x4, offset = 0x4, fixed_abs, tag = 'smem constant byte address 0x4 - core index']
  #allocation1 [shape = 'u32[144,128]{1,0:T(1,128)}', space=vmem, size = 0x12000, scoped, tag = 'internal scratch']
  %s0 = inlined_call_operand.vmem [shape: bf16[128,144], index: 0, kind: input, shape index: {}]
  %s1 = inlined_call_operand.vmem [shape: bf16[144,32], index: 1, kind: input, shape index: {}]
  %s2 = inlined_call_operand.vmem [shape: f32[1,32], index: 2, kind: input, shape index: {}]
  %s3 = inlined_call_operand.vmem [shape: bf16[128,32], index: 3, kind: output, shape index: {}]
  %s4 = sld [smem:[#allocation0]]
  $region45: #{tree_forward.7} parent=0
    _
  %s6 = ssub.s32 1, %s4
  %s7 = scalar_select 0, %s6, %s4
  loop: start=0, step=1, limit=4
  $region2: #{tree_forward.7} parent=0 // loop_pre_header
    _
  $region3: #{tree_forward.7} parent=0 // loop_header
    %s9 = sphi 0, %s13
    %p10 = scmp.ge.s32.totalorder %s9, 4
    %s19 = sphi 0, %s21
    %s22 = sphi 0, %s19
    %s23 = sphi 0, %s22
    %s39 = sphi 0, %s23
    %s43 = sphi 0, %s43
    %s45 = sphi 0, %s43
    %s46 = sphi 0, %s45
    %s60 = sphi 0, %s46
    %s64 = sphi 0, %s64
    %s66 = sphi 0, %s64
    %s67 = sphi 0, %s66
    %s81 = sphi 0, %s67
    %s87 = sphi 0, %s89
    %s90 = sphi 0, %s87
    %s91 = sphi 0, %s90
    %s107 = sphi 0, %s91
  $region4: #{tree_forward.7} parent=0 // loop_header_branch
    %12 = sbr.rel (%p10) target = $region8
  $region5: #{tree_forward.7} parent=0 // loop_body
    %s14 = ssub.s32 %s9, 1
    %s15 = ssub.s32 %s9, 2
    %s16 = sadd.s32 %s9, 1
    %s17 = ssub.s32 %s9, %s16
    %p18 = scmp.eq.s32.totalorder %s17, 0
    %s20 = sadd.s32 %s19, 1
    %s21 = scalar_select %p18, %s19, %s20
    %p24 = pneg %p18
    %p25 = scmp.eq.s32.totalorder %s9, 1
    %p26 = por %p24, %p25
    %p27 = scmp.ne.s32.totalorder %s19, %s22
    %p28 = scmp.eq.s32.totalorder %s9, 0
    %p29 = por %p27, %p28
    %p30 = scmp.ne.s32.totalorder %s19, %s22
    %p31 = scmp.eq.s32.totalorder %s14, 1
    %p32 = por %p30, %p31
    %p33 = scmp.ne.s32.totalorder %s22, %s23
    %p34 = scmp.eq.s32.totalorder %s14, 0
    %p35 = por %p33, %p34
    %p36 = scmp.ne.s32.totalorder %s22, %s23
    %p37 = scmp.eq.s32.totalorder %s15, 1
    %p38 = por %p36, %p37
    %p40 = scmp.ne.s32.totalorder %s23, %s39
    %p41 = scmp.eq.s32.totalorder %s15, 0
    %p42 = por %p40, %p41
    %s44 = sadd.s32 %s43, 1
    %p47 = scmp.eq.s32.totalorder %s9, 1
    %p48 = scmp.ne.s32.totalorder %s43, %s45
    %p49 = scmp.eq.s32.totalorder %s9, 0
    %p50 = por %p48, %p49
    %p51 = scmp.ne.s32.totalorder %s43, %s45
    %p52 = scmp.eq.s32.totalorder %s14, 1
    %p53 = por %p51, %p52
    %p54 = scmp.ne.s32.totalorder %s45, %s46
    %p55 = scmp.eq.s32.totalorder %s14, 0
    %p56 = por %p54, %p55
    %p57 = scmp.ne.s32.totalorder %s45, %s46
    %p58 = scmp.eq.s32.totalorder %s15, 1
    %p59 = por %p57, %p58
    %p61 = scmp.ne.s32.totalorder %s46, %s60
    %p62 = scmp.eq.s32.totalorder %s15, 0
    %p63 = por %p61, %p62
    %s65 = sadd.s32 %s64, 1
    %p68 = scmp.eq.s32.totalorder %s9, 1
    %p69 = scmp.ne.s32.totalorder %s64, %s66
    %p70 = scmp.eq.s32.totalorder %s9, 0
    %p71 = por %p69, %p70
    %p72 = scmp.ne.s32.totalorder %s64, %s66
    %p73 = scmp.eq.s32.totalorder %s14, 1
    %p74 = por %p72, %p73
    %p75 = scmp.ne.s32.totalorder %s66, %s67
    %p76 = scmp.eq.s32.totalorder %s14, 0
    %p77 = por %p75, %p76
    %p78 = scmp.ne.s32.totalorder %s66, %s67
    %p79 = scmp.eq.s32.totalorder %s15, 1
    %p80 = por %p78, %p79
    %p82 = scmp.ne.s32.totalorder %s67, %s81
    %p83 = scmp.eq.s32.totalorder %s15, 0
    %p84 = por %p82, %p83
    %s85 = ssub.s32 %s9, %s16
    %p86 = scmp.eq.s32.totalorder %s85, 0
    %s88 = sadd.s32 %s87, 1
    %s89 = scalar_select %p86, %s87, %s88
    %p92 = pneg %p86
    %p93 = scmp.eq.s32.totalorder %s9, 1
    %p94 = por %p92, %p93
    %p95 = scmp.ne.s32.totalorder %s87, %s90
    %p96 = scmp.eq.s32.totalorder %s9, 0
    %p97 = por %p95, %p96
    %p98 = scmp.ne.s32.totalorder %s87, %s90
    %p99 = scmp.eq.s32.totalorder %s14, 1
    %p100 = por %p98, %p99
    %p101 = scmp.ne.s32.totalorder %s90, %s91
    %p102 = scmp.eq.s32.totalorder %s14, 0
    %p103 = por %p101, %p102
    %p104 = scmp.ne.s32.totalorder %s90, %s91
    %p105 = scmp.eq.s32.totalorder %s15, 1
    %p106 = por %p104, %p105
    %p108 = scmp.ne.s32.totalorder %s91, %s107
    %p109 = scmp.eq.s32.totalorder %s15, 0
    %p110 = por %p108, %p109
    %p111 = scmp.le.s32.totalorder 1, %s9
    %p112 = scmp.lt.s32.totalorder %s9, 3
    %p113 = pnand %p111, %p112
    %p114 = pneg %p113
    // Predicated region
    $region9: #{tree_forward.7} parent=5 // pred_check
      _
    $region10: #{tree_forward.7} parent=5 // pred_check_branch
      %116 = sbr.rel (%p113) target = $region12
    $region11: #{tree_forward.7} parent=5 // pred_region
      %s117 = ssub.s32 %s9, 1
      // Predicated region
      $region13: #{tree_forward.7} parent=11 // pred_check
        %p118 = pneg %p56
      $region14: #{tree_forward.7} parent=11 // pred_check_branch
        %120 = sbr.rel (%p118) target = $region16
      $region15: #{tree_forward.7} parent=11 // pred_region
        _
      $region16: #{tree_forward.7} parent=11 // pred_fallthru
        _
      // Predicated region
      $region17: #{tree_forward.7} parent=11 // pred_check
        %p121 = pneg %p77
      $region18: #{tree_forward.7} parent=11 // pred_check_branch
        %123 = sbr.rel (%p121) target = $region20
      $region19: #{tree_forward.7} parent=11 // pred_region
        _
      $region20: #{tree_forward.7} parent=11 // pred_fallthru
        _
    $region12: #{tree_forward.7} parent=5 // pred_fallthru
      _
    %p124 = scmp.lt.s32.totalorder %s9, 2
    // Predicated region
    $region21: #{tree_forward.7} parent=5 // pred_check
      %p125 = pneg %p124
    $region22: #{tree_forward.7} parent=5 // pred_check_branch
      %127 = sbr.rel (%p125) target = $region24
    $region23: #{tree_forward.7} parent=5 // pred_region
      // Predicated region
      $region25: #{tree_forward.7} parent=23 // pred_check
        %p128 = pneg %p29
      $region26: #{tree_forward.7} parent=23 // pred_check_branch
        %130 = sbr.rel (%p128) target = $region28
      $region27: #{tree_forward.7} parent=23 // pred_region
        %s131 = smul.u32 8, %s9
        %p132 = scmp.lt.s32.totalorder %s131, 15
        %s133 = scalar_select %p132, %s131, 15
        %s134 = smul.addr %s133, 2
        %s135 = smul.addr %s134, 4
        %s136 = scalar_lea.vmem %s0, %s135
        %s137 = smul.u32 8, %s9
      $region28: #{tree_forward.7} parent=23 // pred_fallthru
        _
    $region24: #{tree_forward.7} parent=5 // pred_fallthru
      _
    %p138 = scmp.le.s32.totalorder 1, %s9
    %p139 = scmp.lt.s32.totalorder %s9, 3
    %p140 = pnand %p138, %p139
    %p141 = pneg %p140
    // Predicated region
    $region29: #{tree_forward.7} parent=5 // pred_check
      _
    $region30: #{tree_forward.7} parent=5 // pred_check_branch
      %143 = sbr.rel (%p140) target = $region32
    $region31: #{tree_forward.7} parent=5 // pred_region
      %s144 = ssub.s32 %s9, 1
      %s145 = smul.u32 8, %s14
      %p146 = scmp.lt.s32.totalorder %s145, 15
      %s147 = scalar_select %p146, %s145, 15
      %s148 = smul.addr %s147, 2
      %s149 = smul.addr %s148, 4
      %s150 = scalar_lea.vmem %s0, %s149
      %p151 = pneg %p35
      %p152 = pneg %p32
      %p153 = pneg %p56
      %p154 = pneg %p53
      %p155 = pneg %p77
      %p156 = pneg %p74
      %p157 = pneg %p103
      %p158 = pneg %p100
      %s159 = smul.u32 8, %s14
      %p160 = scmp.lt.s32.totalorder %s159, 15
      %s161 = scalar_select %p160, %s159, 15
      %s162 = smul.addr %s161, 4
      %s163 = scalar_lea.vmem %s3, %s162
      %s164 = smul.u32 8, %s14
      %p165 = scmp.lt.s32.totalorder %s164, 15
      %s166 = scalar_select %p165, %s164, 15
      %s167 = smul.addr %s166, 2
      %s168 = smul.addr %s167, 4
      %s169 = scalar_lea.vmem %s0, %s168
      %s170 = smul.u32 8, %s14
      %s171 = smul.u32 8, %s14
      %p172 = scmp.lt.s32.totalorder %s171, 15
      %s173 = scalar_select %p172, %s171, 15
      %s174 = smul.addr %s173, 4
      %s175 = scalar_lea.vmem %s3, %s174
      %s176 = smul.u32 8, %s14
      %v178 = vld [vmem:[%s169] sm:$0xff]
      %v179 = vld [vmem:[%s169 + $0x8] sm:$0xff]
      %v180 = vld [vmem:[%s169 + $0x10] sm:$0xff]
      %v181 = vld [vmem:[%s169 + $0x18] sm:$0xff]
      %v182 = vld [vmem:[%s169 + $0x20] sm:$0xff]
      %v183 = vld [vmem:[%s169 + $0x28] sm:$0xff]
      %v184 = vld [vmem:[%s169 + $0x30] sm:$0xff]
      %v185 = vld [vmem:[%s169 + $0x38] sm:$0xff]
      %v186 = vld [vmem:[%s1] sm:$0xf]
      %v187 = vld [vmem:[%s1 + $0x4] sm:$0xf]
      %v188 = vld [vmem:[%s1 + $0x8] sm:$0xf]
      %v189 = vld [vmem:[%s1 + $0xc] sm:$0xf]
      %v190 = vld [vmem:[%s1 + $0x10] sm:$0xf]
      %v191 = vld [vmem:[%s1 + $0x14] sm:$0xf]
      %v192 = vld [vmem:[%s1 + $0x18] sm:$0xf]
      %v193 = vld [vmem:[%s1 + $0x1c] sm:$0xf]
      %v194 = vld [vmem:[%s1 + $0x20] sm:$0xf]
      %v195 = vld [vmem:[%s1 + $0x24] sm:$0xf]
      %v196 = vld [vmem:[%s1 + $0x28] sm:$0xf]
      %v197 = vld [vmem:[%s1 + $0x2c] sm:$0xf]
      %v198 = vld [vmem:[%s1 + $0x30] sm:$0xf]
      %v199 = vld [vmem:[%s1 + $0x34] sm:$0xf]
      %v200 = vld [vmem:[%s1 + $0x38] sm:$0xf]
      %v201 = vld [vmem:[%s1 + $0x3c] sm:$0xf]
      %v202 = vld [vmem:[%s1 + $0x40] sm:$0xf]
      %v203 = vld [vmem:[%s1 + $0x44] sm:$0xf]
      %v204 = vld [vmem:[%s2] sm:$0x1]
      %v206 = vlaneseq
      %v207 = vshrl.u32 %v206, 7
      %v208 = vsub.s32 0, %v207
      %v209 = vrot.slane %v204, %v208
      %v219 = vunpack.c.l.b16 %v178
      %v220 = vunpack.c.h.b16 %v178
      %v221 = vunpack.c.l.b16 %v179
      %v222 = vunpack.c.h.b16 %v179
      %v223 = vunpack.c.l.b16 %v180
      %v224 = vunpack.c.h.b16 %v180
      %v225 = vunpack.c.l.b16 %v181
      %v226 = vunpack.c.h.b16 %v181
      %v227 = vunpack.c.l.b16 %v182
      %v228 = vunpack.c.h.b16 %v182
      %v229 = vunpack.c.l.b16 %v183
      %v230 = vunpack.c.h.b16 %v183
      %v231 = vunpack.c.l.b16 %v184
      %v232 = vunpack.c.h.b16 %v184
      %v233 = vunpack.c.l.b16 %v185
      %v234 = vunpack.c.h.b16 %v185
      %v235 = vpack.c.b16 %v221, %v219
      %v236 = vpack.c.b16 %v222, %v220
      %v237 = vpack.c.b16 %v225, %v223
      %v238 = vpack.c.b16 %v226, %v224
      %v239 = vpack.c.b16 %v229, %v227
      %v240 = vpack.c.b16 %v230, %v228
      %v241 = vpack.c.b16 %v233, %v231
      %v242 = vpack.c.b16 %v234, %v232
      %v265 = vunpack.c.l.b16 %v186
      %v266 = vunpack.c.l.b16 %v187
      %v267 = vunpack.c.l.b16 %v188
      %v268 = vunpack.c.l.b16 %v189
      %v269 = vunpack.c.l.b16 %v190
      %v270 = vunpack.c.l.b16 %v191
      %v271 = vunpack.c.l.b16 %v192
      %v272 = vunpack.c.l.b16 %v193
      %v273 = vunpack.c.l.b16 %v194
      %v274 = vunpack.c.l.b16 %v195
      %v275 = vunpack.c.l.b16 %v196
      %v276 = vunpack.c.l.b16 %v197
      %v277 = vunpack.c.l.b16 %v198
      %v278 = vunpack.c.l.b16 %v199
      %v279 = vunpack.c.l.b16 %v200
      %v280 = vunpack.c.l.b16 %v201
      %v281 = vunpack.c.l.b16 %v202
      %v282 = vunpack.c.l.b16 %v203
      %v283 = vpack.c.b16 %v266, %v265
      %v284 = vpack.c.b16 %v268, %v267
      %v285 = vpack.c.b16 %v270, %v269
      %v286 = vpack.c.b16 %v272, %v271
      %v287 = vpack.c.b16 %v274, %v273
      %v288 = vpack.c.b16 %v276, %v275
      %v289 = vpack.c.b16 %v278, %v277
      %v290 = vpack.c.b16 %v280, %v279
      %v291 = vpack.c.b16 %v282, %v281
      %vm301 = vcmask 130048
      %v303 = vsel %vm301, %v236, 0
      %v306 = vsel %vm301, %v238, 0
      %v309 = vsel %vm301, %v240, 0
      %v312 = vsel %vm301, %v242, 0
      %314 = vmatprep.subr.bf16.mxu0 0
      %315 = vmatpush1.bf16.msra.mxu0 %v283
      %316 = vmatprep.subr.bf16.mxu0 0
      %317 = vmatpush1.bf16.msra.mxu0 %v284
      %318 = vmatprep.subr.bf16.mxu0 0
      %319 = vmatpush1.bf16.msra.mxu0 %v285
      %320 = vmatprep.subr.bf16.mxu0 0
      %321 = vmatpush1.bf16.msra.mxu0 %v286
      %322 = vmatprep.subr.bf16.mxu0 0
      %323 = vmatpush1.bf16.msra.mxu0 %v287
      %324 = vmatprep.subr.bf16.mxu0 0
      %325 = vmatpush1.bf16.msra.mxu0 %v288
      %326 = vmatprep.subr.bf16.mxu0 0
      %327 = vmatpush1.bf16.msra.mxu0 %v289
      %328 = vmatprep.subr.bf16.mxu0 0
      %329 = vmatpush1.bf16.msra.mxu0 %v290
      %330 = vmatprep.subr.bf16.mxu0 0
      %331 = vmatpush1.bf16.msra.mxu0 %v291
      %332 = vmatprep.subr.bf16.mxu0 0
      %333 = vmatpush1.bf16.msra.mxu0 0
      %334 = vmatprep.subr.bf16.mxu0 0
      %335 = vmatpush1.bf16.msra.mxu0 0
      %336 = vmatprep.subr.bf16.mxu0 0
      %337 = vmatpush1.bf16.msra.mxu0 0
      %338 = vmatprep.subr.bf16.mxu0 0
      %339 = vmatpush1.bf16.msra.mxu0 0
      %340 = vmatprep.subr.bf16.mxu0 0
      %341 = vmatpush1.bf16.msra.mxu0 0
      %342 = vmatprep.subr.bf16.mxu0 0
      %343 = vmatpush1.bf16.msra.mxu0 0
      %344 = vmatprep.subr.bf16.mxu0 0
      %345 = vmatpush1.bf16.msra.mxu0 0
      %346 = vmatprep.mubr.bf16.mxu0 %v303
      %347 = vmatmul.mubr.bf16.gmra.mrb[0].mxu0 %v235
      %v348 = vpop.f32.mrb[0].mxu0
      %v349 = vadd.f32 %v209, %v348
      %v350 = vpop.f32.mrb[0].mxu0
      %v351 = vpop.f32.mrb[0].mxu0
      %v352 = vadd.f32 %v209, %v351
      %v353 = vpop.f32.mrb[0].mxu0
      %354 = vmatprep.mubr.bf16.mxu0 %v306
      %355 = vmatmul.mubr.bf16.gmra.mrb[0].mxu0 %v237
      %v356 = vpop.f32.mrb[0].mxu0
      %v357 = vadd.f32 %v209, %v356
      %v358 = vpop.f32.mrb[0].mxu0
      %v359 = vpop.f32.mrb[0].mxu0
      %v360 = vadd.f32 %v209, %v359
      %v361 = vpop.f32.mrb[0].mxu0
      %362 = vmatprep.mubr.bf16.mxu0 %v309
      %363 = vmatmul.mubr.bf16.gmra.mrb[0].mxu0 %v239
      %v364 = vpop.f32.mrb[0].mxu0
      %v365 = vadd.f32 %v209, %v364
      %v366 = vpop.f32.mrb[0].mxu0
      %v367 = vpop.f32.mrb[0].mxu0
      %v368 = vadd.f32 %v209, %v367
      %v369 = vpop.f32.mrb[0].mxu0
      %370 = vmatprep.mubr.bf16.mxu0 %v312
      %371 = vmatmul.mubr.bf16.gmra.mrb[0].mxu0 %v241
      %v372 = vpop.f32.mrb[0].mxu0
      %v373 = vadd.f32 %v209, %v372
      %v374 = vpop.f32.mrb[0].mxu0
      %v375 = vpop.f32.mrb[0].mxu0
      %v376 = vadd.f32 %v209, %v375
      %v377 = vpop.f32.mrb[0].mxu0
      %378 = vdwg.mxu0
      %v379 = vmax.f32 %v349, 0.0
      %v380 = vmax.f32 %v352, 0.0
      %v381 = vmax.f32 %v357, 0.0
      %v382 = vmax.f32 %v360, 0.0
      %v383 = vmax.f32 %v365, 0.0
      %v384 = vmax.f32 %v368, 0.0
      %v385 = vmax.f32 %v373, 0.0
      %v386 = vmax.f32 %v376, 0.0
      %v387 = vpack.c.bf16 %v380, %v379
      %v388 = vpack.c.bf16 %v382, %v381
      %v389 = vpack.c.bf16 %v384, %v383
      %v390 = vpack.c.bf16 %v386, %v385
      %v395 = vunpack.c.l.b16 %v387
      %v396 = vunpack.c.h.b16 %v387
      %v397 = vunpack.c.l.b16 %v388
      %v398 = vunpack.c.h.b16 %v388
      %v399 = vunpack.c.l.b16 %v389
      %v400 = vunpack.c.h.b16 %v389
      %v401 = vunpack.c.l.b16 %v390
      %v402 = vunpack.c.h.b16 %v390
      %v403 = vpack.c.b16 %v395, %v395
      %v404 = vpack.c.b16 %v396, %v396
      %v405 = vpack.c.b16 %v397, %v397
      %v406 = vpack.c.b16 %v398, %v398
      %v407 = vpack.c.b16 %v399, %v399
      %v408 = vpack.c.b16 %v400, %v400
      %v409 = vpack.c.b16 %v401, %v401
      %v410 = vpack.c.b16 %v402, %v402
      %vm419 = vcmask 257024
      %420 = vst.msk [vmem:[%s175] sm:$0xf] %vm419, %v403
      %421 = vst.msk [vmem:[%s175 + $0x4] sm:$0xf] %vm419, %v404
      %422 = vst.msk [vmem:[%s175 + $0x8] sm:$0xf] %vm419, %v405
      %423 = vst.msk [vmem:[%s175 + $0xc] sm:$0xf] %vm419, %v406
      %424 = vst.msk [vmem:[%s175 + $0x10] sm:$0xf] %vm419, %v407
      %425 = vst.msk [vmem:[%s175 + $0x14] sm:$0xf] %vm419, %v408
      %426 = vst.msk [vmem:[%s175 + $0x18] sm:$0xf] %vm419, %v409
      %427 = vst.msk [vmem:[%s175 + $0x1c] sm:$0xf] %vm419, %v410
      %s428 = smul.u32 8, %s14
      %p429 = scmp.lt.s32.totalorder %s428, 15
      %s430 = scalar_select %p429, %s428, 15
      %s431 = smul.addr %s430, 4
      %s432 = scalar_lea.vmem %s3, %s431
      // Predicated region
      $region33: #{tree_forward.7} parent=31 // pred_check
        %p433 = pneg %p100
      $region34: #{tree_forward.7} parent=31 // pred_check_branch
        %435 = sbr.rel (%p433) target = $region36
      $region35: #{tree_forward.7} parent=31 // pred_region
        %s436 = smul.u32 8, %s14
      $region36: #{tree_forward.7} parent=31 // pred_fallthru
        _
    $region32: #{tree_forward.7} parent=5 // pred_fallthru
      _
    %p437 = scmp.le.s32.totalorder 2, %s9
    // Predicated region
    $region37: #{tree_forward.7} parent=5 // pred_check
      %p438 = pneg %p437
    $region38: #{tree_forward.7} parent=5 // pred_check_branch
      %440 = sbr.rel (%p438) target = $region40
    $region39: #{tree_forward.7} parent=5 // pred_region
      %s441 = ssub.s32 %s9, 2
      // Predicated region
      $region41: #{tree_forward.7} parent=39 // pred_check
        %p442 = pneg %p106
      $region42: #{tree_forward.7} parent=39 // pred_check_branch
        %444 = sbr.rel (%p442) target = $region44
      $region43: #{tree_forward.7} parent=39 // pred_region
        %s445 = smul.u32 8, %s15
        %p446 = scmp.lt.s32.totalorder %s445, 15
        %s447 = scalar_select %p446, %s445, 15
        %s448 = smul.addr %s447, 4
        %s449 = scalar_lea.vmem %s3, %s448
      $region44: #{tree_forward.7} parent=39 // pred_fallthru
        _
    $region40: #{tree_forward.7} parent=5 // pred_fallthru
      _
  $region6: #{tree_forward.7} parent=0 // loop_footer
    %s13 = sadd.s32 1, %s9
  $region7: #{tree_forward.7} parent=0 // loop_footer_branch
    %8 = sbr.rel target = $region3
  $region8: #{tree_forward.7} parent=0 // loop_exit
    _

// kernel: tree_forward.6
$region0: #{tree_forward.6}
  #allocation0 [shape = 'u32[]', space=smem, size = 0x4, offset = 0x4, fixed_abs, tag = 'smem constant byte address 0x4 - core index']
  #allocation1 [shape = 'u32[144,128]{1,0:T(1,128)}', space=vmem, size = 0x12000, scoped, tag = 'internal scratch']
  %s0 = inlined_call_operand.vmem [shape: bf16[128,16], index: 0, kind: input, shape index: {}]
  %s1 = inlined_call_operand.vmem [shape: bf16[16,32], index: 1, kind: input, shape index: {}]
  %s2 = inlined_call_operand.vmem [shape: f32[1,32], index: 2, kind: input, shape index: {}]
  %s3 = inlined_call_operand.vmem [shape: bf16[128,32], index: 3, kind: output, shape index: {}]
  %s4 = sld [smem:[#allocation0]]
  $region45: #{tree_forward.6} parent=0
    _
  %s6 = ssub.s32 1, %s4
  %s7 = scalar_select 0, %s6, %s4
  loop: start=0, step=1, limit=4
  $region2: #{tree_forward.6} parent=0 // loop_pre_header
    _
  $region3: #{tree_forward.6} parent=0 // loop_header
    %s9 = sphi 0, %s13
    %p10 = scmp.ge.s32.totalorder %s9, 4
    %s19 = sphi 0, %s21
    %s22 = sphi 0, %s19
    %s23 = sphi 0, %s22
    %s39 = sphi 0, %s23
    %s43 = sphi 0, %s43
    %s45 = sphi 0, %s43
    %s46 = sphi 0, %s45
    %s60 = sphi 0, %s46
    %s64 = sphi 0, %s64
    %s66 = sphi 0, %s64
    %s67 = sphi 0, %s66
    %s81 = sphi 0, %s67
    %s87 = sphi 0, %s89
    %s90 = sphi 0, %s87
    %s91 = sphi 0, %s90
    %s107 = sphi 0, %s91
  $region4: #{tree_forward.6} parent=0 // loop_header_branch
    %12 = sbr.rel (%p10) target = $region8
  $region5: #{tree_forward.6} parent=0 // loop_body
    %s14 = ssub.s32 %s9, 1
    %s15 = ssub.s32 %s9, 2
    %s16 = sadd.s32 %s9, 1
    %s17 = ssub.s32 %s9, %s16
    %p18 = scmp.eq.s32.totalorder %s17, 0
    %s20 = sadd.s32 %s19, 1
    %s21 = scalar_select %p18, %s19, %s20
    %p24 = pneg %p18
    %p25 = scmp.eq.s32.totalorder %s9, 1
    %p26 = por %p24, %p25
    %p27 = scmp.ne.s32.totalorder %s19, %s22
    %p28 = scmp.eq.s32.totalorder %s9, 0
    %p29 = por %p27, %p28
    %p30 = scmp.ne.s32.totalorder %s19, %s22
    %p31 = scmp.eq.s32.totalorder %s14, 1
    %p32 = por %p30, %p31
    %p33 = scmp.ne.s32.totalorder %s22, %s23
    %p34 = scmp.eq.s32.totalorder %s14, 0
    %p35 = por %p33, %p34
    %p36 = scmp.ne.s32.totalorder %s22, %s23
    %p37 = scmp.eq.s32.totalorder %s15, 1
    %p38 = por %p36, %p37
    %p40 = scmp.ne.s32.totalorder %s23, %s39
    %p41 = scmp.eq.s32.totalorder %s15, 0
    %p42 = por %p40, %p41
    %s44 = sadd.s32 %s43, 1
    %p47 = scmp.eq.s32.totalorder %s9, 1
    %p48 = scmp.ne.s32.totalorder %s43, %s45
    %p49 = scmp.eq.s32.totalorder %s9, 0
    %p50 = por %p48, %p49
    %p51 = scmp.ne.s32.totalorder %s43, %s45
    %p52 = scmp.eq.s32.totalorder %s14, 1
    %p53 = por %p51, %p52
    %p54 = scmp.ne.s32.totalorder %s45, %s46
    %p55 = scmp.eq.s32.totalorder %s14, 0
    %p56 = por %p54, %p55
    %p57 = scmp.ne.s32.totalorder %s45, %s46
    %p58 = scmp.eq.s32.totalorder %s15, 1
    %p59 = por %p57, %p58
    %p61 = scmp.ne.s32.totalorder %s46, %s60
    %p62 = scmp.eq.s32.totalorder %s15, 0
    %p63 = por %p61, %p62
    %s65 = sadd.s32 %s64, 1
    %p68 = scmp.eq.s32.totalorder %s9, 1
    %p69 = scmp.ne.s32.totalorder %s64, %s66
    %p70 = scmp.eq.s32.totalorder %s9, 0
    %p71 = por %p69, %p70
    %p72 = scmp.ne.s32.totalorder %s64, %s66
    %p73 = scmp.eq.s32.totalorder %s14, 1
    %p74 = por %p72, %p73
    %p75 = scmp.ne.s32.totalorder %s66, %s67
    %p76 = scmp.eq.s32.totalorder %s14, 0
    %p77 = por %p75, %p76
    %p78 = scmp.ne.s32.totalorder %s66, %s67
    %p79 = scmp.eq.s32.totalorder %s15, 1
    %p80 = por %p78, %p79
    %p82 = scmp.ne.s32.totalorder %s67, %s81
    %p83 = scmp.eq.s32.totalorder %s15, 0
    %p84 = por %p82, %p83
    %s85 = ssub.s32 %s9, %s16
    %p86 = scmp.eq.s32.totalorder %s85, 0
    %s88 = sadd.s32 %s87, 1
    %s89 = scalar_select %p86, %s87, %s88
    %p92 = pneg %p86
    %p93 = scmp.eq.s32.totalorder %s9, 1
    %p94 = por %p92, %p93
    %p95 = scmp.ne.s32.totalorder %s87, %s90
    %p96 = scmp.eq.s32.totalorder %s9, 0
    %p97 = por %p95, %p96
    %p98 = scmp.ne.s32.totalorder %s87, %s90
    %p99 = scmp.eq.s32.totalorder %s14, 1
    %p100 = por %p98, %p99
    %p101 = scmp.ne.s32.totalorder %s90, %s91
    %p102 = scmp.eq.s32.totalorder %s14, 0
    %p103 = por %p101, %p102
    %p104 = scmp.ne.s32.totalorder %s90, %s91
    %p105 = scmp.eq.s32.totalorder %s15, 1
    %p106 = por %p104, %p105
    %p108 = scmp.ne.s32.totalorder %s91, %s107
    %p109 = scmp.eq.s32.totalorder %s15, 0
    %p110 = por %p108, %p109
    %p111 = scmp.le.s32.totalorder 1, %s9
    %p112 = scmp.lt.s32.totalorder %s9, 3
    %p113 = pnand %p111, %p112
    %p114 = pneg %p113
    // Predicated region
    $region9: #{tree_forward.6} parent=5 // pred_check
      _
    $region10: #{tree_forward.6} parent=5 // pred_check_branch
      %116 = sbr.rel (%p113) target = $region12
    $region11: #{tree_forward.6} parent=5 // pred_region
      %s117 = ssub.s32 %s9, 1
      // Predicated region
      $region13: #{tree_forward.6} parent=11 // pred_check
        %p118 = pneg %p56
      $region14: #{tree_forward.6} parent=11 // pred_check_branch
        %120 = sbr.rel (%p118) target = $region16
      $region15: #{tree_forward.6} parent=11 // pred_region
        _
      $region16: #{tree_forward.6} parent=11 // pred_fallthru
        _
      // Predicated region
      $region17: #{tree_forward.6} parent=11 // pred_check
        %p121 = pneg %p77
      $region18: #{tree_forward.6} parent=11 // pred_check_branch
        %123 = sbr.rel (%p121) target = $region20
      $region19: #{tree_forward.6} parent=11 // pred_region
        _
      $region20: #{tree_forward.6} parent=11 // pred_fallthru
        _
    $region12: #{tree_forward.6} parent=5 // pred_fallthru
      _
    %p124 = scmp.lt.s32.totalorder %s9, 2
    // Predicated region
    $region21: #{tree_forward.6} parent=5 // pred_check
      %p125 = pneg %p124
    $region22: #{tree_forward.6} parent=5 // pred_check_branch
      %127 = sbr.rel (%p125) target = $region24
    $region23: #{tree_forward.6} parent=5 // pred_region
      // Predicated region
      $region25: #{tree_forward.6} parent=23 // pred_check
        %p128 = pneg %p29
      $region26: #{tree_forward.6} parent=23 // pred_check_branch
        %130 = sbr.rel (%p128) target = $region28
      $region27: #{tree_forward.6} parent=23 // pred_region
        %s131 = smul.u32 8, %s9
        %p132 = scmp.lt.s32.totalorder %s131, 15
        %s133 = scalar_select %p132, %s131, 15
        %s134 = smul.addr %s133, 4
        %s135 = scalar_lea.vmem %s0, %s134
        %s136 = smul.u32 8, %s9
      $region28: #{tree_forward.6} parent=23 // pred_fallthru
        _
    $region24: #{tree_forward.6} parent=5 // pred_fallthru
      _
    %p137 = scmp.le.s32.totalorder 1, %s9
    %p138 = scmp.lt.s32.totalorder %s9, 3
    %p139 = pnand %p137, %p138
    %p140 = pneg %p139
    // Predicated region
    $region29: #{tree_forward.6} parent=5 // pred_check
      _
    $region30: #{tree_forward.6} parent=5 // pred_check_branch
      %142 = sbr.rel (%p139) target = $region32
    $region31: #{tree_forward.6} parent=5 // pred_region
      %s143 = ssub.s32 %s9, 1
      %s144 = smul.u32 8, %s14
      %p145 = scmp.lt.s32.totalorder %s144, 15
      %s146 = scalar_select %p145, %s144, 15
      %s147 = smul.addr %s146, 4
      %s148 = scalar_lea.vmem %s0, %s147
      %p149 = pneg %p35
      %p150 = pneg %p32
      %p151 = pneg %p56
      %p152 = pneg %p53
      %p153 = pneg %p77
      %p154 = pneg %p74
      %p155 = pneg %p103
      %p156 = pneg %p100
      %s157 = smul.u32 8, %s14
      %p158 = scmp.lt.s32.totalorder %s157, 15
      %s159 = scalar_select %p158, %s157, 15
      %s160 = smul.addr %s159, 4
      %s161 = scalar_lea.vmem %s3, %s160
      %s162 = smul.u32 8, %s14
      %p163 = scmp.lt.s32.totalorder %s162, 15
      %s164 = scalar_select %p163, %s162, 15
      %s165 = smul.addr %s164, 4
      %s166 = scalar_lea.vmem %s0, %s165
      %s167 = smul.u32 8, %s14
      %s168 = smul.u32 8, %s14
      %p169 = scmp.lt.s32.totalorder %s168, 15
      %s170 = scalar_select %p169, %s168, 15
      %s171 = smul.addr %s170, 4
      %s172 = scalar_lea.vmem %s3, %s171
      %s173 = smul.u32 8, %s14
      %v175 = vld [vmem:[%s166] sm:$0xf]
      %v176 = vld [vmem:[%s166 + $0x4] sm:$0xf]
      %v177 = vld [vmem:[%s166 + $0x8] sm:$0xf]
      %v178 = vld [vmem:[%s166 + $0xc] sm:$0xf]
      %v179 = vld [vmem:[%s166 + $0x10] sm:$0xf]
      %v180 = vld [vmem:[%s166 + $0x14] sm:$0xf]
      %v181 = vld [vmem:[%s166 + $0x18] sm:$0xf]
      %v182 = vld [vmem:[%s166 + $0x1c] sm:$0xf]
      %v183 = vld [vmem:[%s1] sm:$0xf]
      %v184 = vld [vmem:[%s1 + $0x4] sm:$0xf]
      %v185 = vld [vmem:[%s2] sm:$0x1]
      %v187 = vlaneseq
      %v188 = vshrl.u32 %v187, 7
      %v189 = vsub.s32 0, %v188
      %v190 = vrot.slane %v185, %v189
      %v200 = vunpack.c.l.b16 %v175
      %v201 = vunpack.c.l.b16 %v176
      %v202 = vunpack.c.l.b16 %v177
      %v203 = vunpack.c.l.b16 %v178
      %v204 = vunpack.c.l.b16 %v179
      %v205 = vunpack.c.l.b16 %v180
      %v206 = vunpack.c.l.b16 %v181
      %v207 = vunpack.c.l.b16 %v182
      %v208 = vpack.c.b16 %v201, %v200
      %v209 = vpack.c.b16 %v203, %v202
      %v210 = vpack.c.b16 %v205, %v204
      %v211 = vpack.c.b16 %v207, %v206
      %v214 = vunpack.c.l.b16 %v183
      %v215 = vunpack.c.l.b16 %v184
      %v216 = vpack.c.b16 %v215, %v214
      %vm218 = vcmask 130048
      %v220 = vsel %vm218, %v208, 0
      %v223 = vsel %vm218, %v209, 0
      %v226 = vsel %vm218, %v210, 0
      %v229 = vsel %vm218, %v211, 0
      %231 = vmatprep.subr.bf16.mxu0 0
      %232 = vmatpush1.bf16.msra.mxu0 %v216
      %233 = vmatprep.subr.bf16.mxu0 0
      %234 = vmatpush1.bf16.msra.mxu0 0
      %235 = vmatprep.subr.bf16.mxu0 0
      %236 = vmatpush1.bf16.msra.mxu0 0
      %237 = vmatprep.subr.bf16.mxu0 0
      %238 = vmatpush1.bf16.msra.mxu0 0
      %239 = vmatprep.subr.bf16.mxu0 0
      %240 = vmatpush1.bf16.msra.mxu0 0
      %241 = vmatprep.subr.bf16.mxu0 0
      %242 = vmatpush1.bf16.msra.mxu0 0
      %243 = vmatprep.subr.bf16.mxu0 0
      %244 = vmatpush1.bf16.msra.mxu0 0
      %245 = vmatprep.subr.bf16.mxu0 0
      %246 = vmatpush1.bf16.msra.mxu0 0
      %247 = vmatprep.subr.bf16.mxu0 0
      %248 = vmatpush1.bf16.msra.mxu0 0
      %249 = vmatprep.subr.bf16.mxu0 0
      %250 = vmatpush1.bf16.msra.mxu0 0
      %251 = vmatprep.subr.bf16.mxu0 0
      %252 = vmatpush1.bf16.msra.mxu0 0
      %253 = vmatprep.subr.bf16.mxu0 0
      %254 = vmatpush1.bf16.msra.mxu0 0
      %255 = vmatprep.subr.bf16.mxu0 0
      %256 = vmatpush1.bf16.msra.mxu0 0
      %257 = vmatprep.subr.bf16.mxu0 0
      %258 = vmatpush1.bf16.msra.mxu0 0
      %259 = vmatprep.subr.bf16.mxu0 0
      %260 = vmatpush1.bf16.msra.mxu0 0
      %261 = vmatprep.subr.bf16.mxu0 0
      %262 = vmatpush1.bf16.msra.mxu0 0
      %263 = vmatprep.mubr.bf16.mxu0 0
      %264 = vmatmul.mubr.bf16.gmra.mrb[0].mxu0 %v220
      %v265 = vpop.f32.mrb[0].mxu0
      %v266 = vadd.f32 %v190, %v265
      %v267 = vpop.f32.mrb[0].mxu0
      %v268 = vpop.f32.mrb[0].mxu0
      %v269 = vadd.f32 %v190, %v268
      %v270 = vpop.f32.mrb[0].mxu0
      %271 = vmatprep.mubr.bf16.mxu0 0
      %272 = vmatmul.mubr.bf16.gmra.mrb[0].mxu0 %v223
      %v273 = vpop.f32.mrb[0].mxu0
      %v274 = vadd.f32 %v190, %v273
      %v275 = vpop.f32.mrb[0].mxu0
      %v276 = vpop.f32.mrb[0].mxu0
      %v277 = vadd.f32 %v190, %v276
      %v278 = vpop.f32.mrb[0].mxu0
      %279 = vmatprep.mubr.bf16.mxu0 0
      %280 = vmatmul.mubr.bf16.gmra.mrb[0].mxu0 %v226
      %v281 = vpop.f32.mrb[0].mxu0
      %v282 = vadd.f32 %v190, %v281
      %v283 = vpop.f32.mrb[0].mxu0
      %v284 = vpop.f32.mrb[0].mxu0
      %v285 = vadd.f32 %v190, %v284
      %v286 = vpop.f32.mrb[0].mxu0
      %287 = vmatprep.mubr.bf16.mxu0 0
      %288 = vmatmul.mubr.bf16.gmra.mrb[0].mxu0 %v229
      %v289 = vpop.f32.mrb[0].mxu0
      %v290 = vadd.f32 %v190, %v289
      %v291 = vpop.f32.mrb[0].mxu0
      %v292 = vpop.f32.mrb[0].mxu0
      %v293 = vadd.f32 %v190, %v292
      %v294 = vpop.f32.mrb[0].mxu0
      %295 = vdwg.mxu0
      %v296 = vpack.c.bf16 %v269, %v266
      %v297 = vpack.c.bf16 %v277, %v274
      %v298 = vpack.c.bf16 %v285, %v282
      %v299 = vpack.c.bf16 %v293, %v290
      %v304 = vunpack.c.l.b16 %v296
      %v305 = vunpack.c.h.b16 %v296
      %v306 = vunpack.c.l.b16 %v297
      %v307 = vunpack.c.h.b16 %v297
      %v308 = vunpack.c.l.b16 %v298
      %v309 = vunpack.c.h.b16 %v298
      %v310 = vunpack.c.l.b16 %v299
      %v311 = vunpack.c.h.b16 %v299
      %v312 = vpack.c.b16 %v304, %v304
      %v313 = vpack.c.b16 %v305, %v305
      %v314 = vpack.c.b16 %v306, %v306
      %v315 = vpack.c.b16 %v307, %v307
      %v316 = vpack.c.b16 %v308, %v308
      %v317 = vpack.c.b16 %v309, %v309
      %v318 = vpack.c.b16 %v310, %v310
      %v319 = vpack.c.b16 %v311, %v311
      %vm328 = vcmask 257024
      %329 = vst.msk [vmem:[%s172] sm:$0xf] %vm328, %v312
      %330 = vst.msk [vmem:[%s172 + $0x4] sm:$0xf] %vm328, %v313
      %331 = vst.msk [vmem:[%s172 + $0x8] sm:$0xf] %vm328, %v314
      %332 = vst.msk [vmem:[%s172 + $0xc] sm:$0xf] %vm328, %v315
      %333 = vst.msk [vmem:[%s172 + $0x10] sm:$0xf] %vm328, %v316
      %334 = vst.msk [vmem:[%s172 + $0x14] sm:$0xf] %vm328, %v317
      %335 = vst.msk [vmem:[%s172 + $0x18] sm:$0xf] %vm328, %v318
      %336 = vst.msk [vmem:[%s172 + $0x1c] sm:$0xf] %vm328, %v319
      %s337 = smul.u32 8, %s14
      %p338 = scmp.lt.s32.totalorder %s337, 15
      %s339 = scalar_select %p338, %s337, 15
      %s340 = smul.addr %s339, 4
      %s341 = scalar_lea.vmem %s3, %s340
      // Predicated region
      $region33: #{tree_forward.6} parent=31 // pred_check
        %p342 = pneg %p100
      $region34: #{tree_forward.6} parent=31 // pred_check_branch
        %344 = sbr.rel (%p342) target = $region36
      $region35: #{tree_forward.6} parent=31 // pred_region
        %s345 = smul.u32 8, %s14
      $region36: #{tree_forward.6} parent=31 // pred_fallthru
        _
    $region32: #{tree_forward.6} parent=5 // pred_fallthru
      _
    %p346 = scmp.le.s32.totalorder 2, %s9
    // Predicated region
    $region37: #{tree_forward.6} parent=5 // pred_check
      %p347 = pneg %p346
    $region38: #{tree_forward.6} parent=5 // pred_check_branch
      %349 = sbr.rel (%p347) target = $region40
    $region39: #{tree_forward.6} parent=5 // pred_region
      %s350 = ssub.s32 %s9, 2
      // Predicated region
      $region41: #{tree_forward.6} parent=39 // pred_check
        %p351 = pneg %p106
      $region42: #{tree_forward.6} parent=39 // pred_check_branch
        %353 = sbr.rel (%p351) target = $region44
      $region43: #{tree_forward.6} parent=39 // pred_region
        %s354 = smul.u32 8, %s15
        %p355 = scmp.lt.s32.totalorder %s354, 15
        %s356 = scalar_select %p355, %s354, 15
        %s357 = smul.addr %s356, 4
        %s358 = scalar_lea.vmem %s3, %s357
      $region44: #{tree_forward.6} parent=39 // pred_fallthru
        _
    $region40: #{tree_forward.6} parent=5 // pred_fallthru
      _
  $region6: #{tree_forward.6} parent=0 // loop_footer
    %s13 = sadd.s32 1, %s9
  $region7: #{tree_forward.6} parent=0 // loop_footer_branch
    %8 = sbr.rel target = $region3
  $region8: #{tree_forward.6} parent=0 // loop_exit
    _

// kernel: tree_forward.8
$region0: #{tree_forward.8}
  #allocation0 [shape = 'u32[]', space=smem, size = 0x4, offset = 0x4, fixed_abs, tag = 'smem constant byte address 0x4 - core index']
  #allocation1 [shape = 'u32[144,128]{1,0:T(1,128)}', space=vmem, size = 0x12000, scoped, tag = 'internal scratch']
  %s0 = inlined_call_operand.vmem [shape: bf16[128,288], index: 0, kind: input, shape index: {}]
  %s1 = inlined_call_operand.vmem [shape: bf16[288,32], index: 1, kind: input, shape index: {}]
  %s2 = inlined_call_operand.vmem [shape: f32[1,32], index: 2, kind: input, shape index: {}]
  %s3 = inlined_call_operand.vmem [shape: bf16[128,32], index: 3, kind: input, shape index: {}]
  %s4 = inlined_call_operand.vmem [shape: bf16[128,32], index: 4, kind: output, shape index: {}]
  %s5 = sld [smem:[#allocation0]]
  $region49: #{tree_forward.8} parent=0
    _
  %s7 = ssub.s32 1, %s5
  %s8 = scalar_select 0, %s7, %s5
  loop: start=0, step=1, limit=4
  $region2: #{tree_forward.8} parent=0 // loop_pre_header
    _
  $region3: #{tree_forward.8} parent=0 // loop_header
    %s10 = sphi 0, %s14
    %p11 = scmp.ge.s32.totalorder %s10, 4
    %s20 = sphi 0, %s22
    %s23 = sphi 0, %s20
    %s24 = sphi 0, %s23
    %s40 = sphi 0, %s24
    %s44 = sphi 0, %s44
    %s46 = sphi 0, %s44
    %s47 = sphi 0, %s46
    %s61 = sphi 0, %s47
    %s65 = sphi 0, %s65
    %s67 = sphi 0, %s65
    %s68 = sphi 0, %s67
    %s82 = sphi 0, %s68
    %s88 = sphi 0, %s90
    %s91 = sphi 0, %s88
    %s92 = sphi 0, %s91
    %s108 = sphi 0, %s92
    %s114 = sphi 0, %s116
    %s117 = sphi 0, %s114
    %s118 = sphi 0, %s117
    %s134 = sphi 0, %s118
  $region4: #{tree_forward.8} parent=0 // loop_header_branch
    %13 = sbr.rel (%p11) target = $region8
  $region5: #{tree_forward.8} parent=0 // loop_body
    %s15 = ssub.s32 %s10, 1
    %s16 = ssub.s32 %s10, 2
    %s17 = sadd.s32 %s10, 1
    %s18 = ssub.s32 %s10, %s17
    %p19 = scmp.eq.s32.totalorder %s18, 0
    %s21 = sadd.s32 %s20, 1
    %s22 = scalar_select %p19, %s20, %s21
    %p25 = pneg %p19
    %p26 = scmp.eq.s32.totalorder %s10, 1
    %p27 = por %p25, %p26
    %p28 = scmp.ne.s32.totalorder %s20, %s23
    %p29 = scmp.eq.s32.totalorder %s10, 0
    %p30 = por %p28, %p29
    %p31 = scmp.ne.s32.totalorder %s20, %s23
    %p32 = scmp.eq.s32.totalorder %s15, 1
    %p33 = por %p31, %p32
    %p34 = scmp.ne.s32.totalorder %s23, %s24
    %p35 = scmp.eq.s32.totalorder %s15, 0
    %p36 = por %p34, %p35
    %p37 = scmp.ne.s32.totalorder %s23, %s24
    %p38 = scmp.eq.s32.totalorder %s16, 1
    %p39 = por %p37, %p38
    %p41 = scmp.ne.s32.totalorder %s24, %s40
    %p42 = scmp.eq.s32.totalorder %s16, 0
    %p43 = por %p41, %p42
    %s45 = sadd.s32 %s44, 1
    %p48 = scmp.eq.s32.totalorder %s10, 1
    %p49 = scmp.ne.s32.totalorder %s44, %s46
    %p50 = scmp.eq.s32.totalorder %s10, 0
    %p51 = por %p49, %p50
    %p52 = scmp.ne.s32.totalorder %s44, %s46
    %p53 = scmp.eq.s32.totalorder %s15, 1
    %p54 = por %p52, %p53
    %p55 = scmp.ne.s32.totalorder %s46, %s47
    %p56 = scmp.eq.s32.totalorder %s15, 0
    %p57 = por %p55, %p56
    %p58 = scmp.ne.s32.totalorder %s46, %s47
    %p59 = scmp.eq.s32.totalorder %s16, 1
    %p60 = por %p58, %p59
    %p62 = scmp.ne.s32.totalorder %s47, %s61
    %p63 = scmp.eq.s32.totalorder %s16, 0
    %p64 = por %p62, %p63
    %s66 = sadd.s32 %s65, 1
    %p69 = scmp.eq.s32.totalorder %s10, 1
    %p70 = scmp.ne.s32.totalorder %s65, %s67
    %p71 = scmp.eq.s32.totalorder %s10, 0
    %p72 = por %p70, %p71
    %p73 = scmp.ne.s32.totalorder %s65, %s67
    %p74 = scmp.eq.s32.totalorder %s15, 1
    %p75 = por %p73, %p74
    %p76 = scmp.ne.s32.totalorder %s67, %s68
    %p77 = scmp.eq.s32.totalorder %s15, 0
    %p78 = por %p76, %p77
    %p79 = scmp.ne.s32.totalorder %s67, %s68
    %p80 = scmp.eq.s32.totalorder %s16, 1
    %p81 = por %p79, %p80
    %p83 = scmp.ne.s32.totalorder %s68, %s82
    %p84 = scmp.eq.s32.totalorder %s16, 0
    %p85 = por %p83, %p84
    %s86 = ssub.s32 %s10, %s17
    %p87 = scmp.eq.s32.totalorder %s86, 0
    %s89 = sadd.s32 %s88, 1
    %s90 = scalar_select %p87, %s88, %s89
    %p93 = pneg %p87
    %p94 = scmp.eq.s32.totalorder %s10, 1
    %p95 = por %p93, %p94
    %p96 = scmp.ne.s32.totalorder %s88, %s91
    %p97 = scmp.eq.s32.totalorder %s10, 0
    %p98 = por %p96, %p97
    %p99 = scmp.ne.s32.totalorder %s88, %s91
    %p100 = scmp.eq.s32.totalorder %s15, 1
    %p101 = por %p99, %p100
    %p102 = scmp.ne.s32.totalorder %s91, %s92
    %p103 = scmp.eq.s32.totalorder %s15, 0
    %p104 = por %p102, %p103
    %p105 = scmp.ne.s32.totalorder %s91, %s92
    %p106 = scmp.eq.s32.totalorder %s16, 1
    %p107 = por %p105, %p106
    %p109 = scmp.ne.s32.totalorder %s92, %s108
    %p110 = scmp.eq.s32.totalorder %s16, 0
    %p111 = por %p109, %p110
    %s112 = ssub.s32 %s10, %s17
    %p113 = scmp.eq.s32.totalorder %s112, 0
    %s115 = sadd.s32 %s114, 1
    %s116 = scalar_select %p113, %s114, %s115
    %p119 = pneg %p113
    %p120 = scmp.eq.s32.totalorder %s10, 1
    %p121 = por %p119, %p120
    %p122 = scmp.ne.s32.totalorder %s114, %s117
    %p123 = scmp.eq.s32.totalorder %s10, 0
    %p124 = por %p122, %p123
    %p125 = scmp.ne.s32.totalorder %s114, %s117
    %p126 = scmp.eq.s32.totalorder %s15, 1
    %p127 = por %p125, %p126
    %p128 = scmp.ne.s32.totalorder %s117, %s118
    %p129 = scmp.eq.s32.totalorder %s15, 0
    %p130 = por %p128, %p129
    %p131 = scmp.ne.s32.totalorder %s117, %s118
    %p132 = scmp.eq.s32.totalorder %s16, 1
    %p133 = por %p131, %p132
    %p135 = scmp.ne.s32.totalorder %s118, %s134
    %p136 = scmp.eq.s32.totalorder %s16, 0
    %p137 = por %p135, %p136
    %p138 = scmp.le.s32.totalorder 1, %s10
    %p139 = scmp.lt.s32.totalorder %s10, 3
    %p140 = pnand %p138, %p139
    %p141 = pneg %p140
    // Predicated region
    $region9: #{tree_forward.8} parent=5 // pred_check
      _
    $region10: #{tree_forward.8} parent=5 // pred_check_branch
      %143 = sbr.rel (%p140) target = $region12
    $region11: #{tree_forward.8} parent=5 // pred_region
      %s144 = ssub.s32 %s10, 1
      // Predicated region
      $region13: #{tree_forward.8} parent=11 // pred_check
        %p145 = pneg %p57
      $region14: #{tree_forward.8} parent=11 // pred_check_branch
        %147 = sbr.rel (%p145) target = $region16
      $region15: #{tree_forward.8} parent=11 // pred_region
        _
      $region16: #{tree_forward.8} parent=11 // pred_fallthru
        _
      // Predicated region
      $region17: #{tree_forward.8} parent=11 // pred_check
        %p148 = pneg %p78
      $region18: #{tree_forward.8} parent=11 // pred_check_branch
        %150 = sbr.rel (%p148) target = $region20
      $region19: #{tree_forward.8} parent=11 // pred_region
        _
      $region20: #{tree_forward.8} parent=11 // pred_fallthru
        _
    $region12: #{tree_forward.8} parent=5 // pred_fallthru
      _
    %p151 = scmp.lt.s32.totalorder %s10, 2
    // Predicated region
    $region21: #{tree_forward.8} parent=5 // pred_check
      %p152 = pneg %p151
    $region22: #{tree_forward.8} parent=5 // pred_check_branch
      %154 = sbr.rel (%p152) target = $region24
    $region23: #{tree_forward.8} parent=5 // pred_region
      // Predicated region
      $region25: #{tree_forward.8} parent=23 // pred_check
        %p155 = pneg %p30
      $region26: #{tree_forward.8} parent=23 // pred_check_branch
        %157 = sbr.rel (%p155) target = $region28
      $region27: #{tree_forward.8} parent=23 // pred_region
        %s158 = smul.u32 8, %s10
        %p159 = scmp.lt.s32.totalorder %s158, 15
        %s160 = scalar_select %p159, %s158, 15
        %s161 = smul.addr %s160, 3
        %s162 = smul.addr %s161, 4
        %s163 = scalar_lea.vmem %s0, %s162
        %s164 = smul.u32 8, %s10
      $region28: #{tree_forward.8} parent=23 // pred_fallthru
        _
      // Predicated region
      $region29: #{tree_forward.8} parent=23 // pred_check
        %p165 = pneg %p98
      $region30: #{tree_forward.8} parent=23 // pred_check_branch
        %167 = sbr.rel (%p165) target = $region32
      $region31: #{tree_forward.8} parent=23 // pred_region
        %s168 = smul.u32 8, %s10
        %p169 = scmp.lt.s32.totalorder %s168, 15
        %s170 = scalar_select %p169, %s168, 15
        %s171 = smul.addr %s170, 4
        %s172 = scalar_lea.vmem %s3, %s171
        %s173 = smul.u32 8, %s10
      $region32: #{tree_forward.8} parent=23 // pred_fallthru
        _
    $region24: #{tree_forward.8} parent=5 // pred_fallthru
      _
    %p174 = scmp.le.s32.totalorder 1, %s10
    %p175 = scmp.lt.s32.totalorder %s10, 3
    %p176 = pnand %p174, %p175
    %p177 = pneg %p176
    // Predicated region
    $region33: #{tree_forward.8} parent=5 // pred_check
      _
    $region34: #{tree_forward.8} parent=5 // pred_check_branch
      %179 = sbr.rel (%p176) target = $region36
    $region35: #{tree_forward.8} parent=5 // pred_region
      %s180 = ssub.s32 %s10, 1
      %s181 = smul.u32 8, %s15
      %p182 = scmp.lt.s32.totalorder %s181, 15
      %s183 = scalar_select %p182, %s181, 15
      %s184 = smul.addr %s183, 3
      %s185 = smul.addr %s184, 4
      %s186 = scalar_lea.vmem %s0, %s185
      %p187 = pneg %p36
      %p188 = pneg %p33
      %p189 = pneg %p57
      %p190 = pneg %p54
      %p191 = pneg %p78
      %p192 = pneg %p75
      %s193 = smul.u32 8, %s15
      %p194 = scmp.lt.s32.totalorder %s193, 15
      %s195 = scalar_select %p194, %s193, 15
      %s196 = smul.addr %s195, 4
      %s197 = scalar_lea.vmem %s3, %s196
      %p198 = pneg %p104
      %p199 = pneg %p101
      %p200 = pneg %p130
      %p201 = pneg %p127
      %s202 = smul.u32 8, %s15
      %p203 = scmp.lt.s32.totalorder %s202, 15
      %s204 = scalar_select %p203, %s202, 15
      %s205 = smul.addr %s204, 4
      %s206 = scalar_lea.vmem %s4, %s205
      %s207 = smul.u32 8, %s15
      %p208 = scmp.lt.s32.totalorder %s207, 15
      %s209 = scalar_select %p208, %s207, 15
      %s210 = smul.addr %s209, 3
      %s211 = smul.addr %s210, 4
      %s212 = scalar_lea.vmem %s0, %s211
      %s213 = smul.u32 8, %s15
      %s214 = smul.u32 8, %s15
      %p215 = scmp.lt.s32.totalorder %s214, 15
      %s216 = scalar_select %p215, %s214, 15
      %s217 = smul.addr %s216, 4
      %s218 = scalar_lea.vmem %s3, %s217
      %s219 = smul.u32 8, %s15
      %s220 = smul.u32 8, %s15
      %p221 = scmp.lt.s32.totalorder %s220, 15
      %s222 = scalar_select %p221, %s220, 15
      %s223 = smul.addr %s222, 4
      %s224 = scalar_lea.vmem %s4, %s223
      %s225 = smul.u32 8, %s15
      %v227 = vld [vmem:[%s212] sm:$0xff]
      %v228 = vld [vmem:[%s212 + $0x8] sm:$0xf]
      %v229 = vld [vmem:[%s212 + $0xc] sm:$0xff]
      %v230 = vld [vmem:[%s212 + $0x14] sm:$0xf]
      %v231 = vld [vmem:[%s212 + $0x18] sm:$0xff]
      %v232 = vld [vmem:[%s212 + $0x20] sm:$0xf]
      %v233 = vld [vmem:[%s212 + $0x24] sm:$0xff]
      %v234 = vld [vmem:[%s212 + $0x2c] sm:$0xf]
      %v235 = vld [vmem:[%s212 + $0x30] sm:$0xff]
      %v236 = vld [vmem:[%s212 + $0x38] sm:$0xf]
      %v237 = vld [vmem:[%s212 + $0x3c] sm:$0xff]
      %v238 = vld [vmem:[%s212 + $0x44] sm:$0xf]
      %v239 = vld [vmem:[%s212 + $0x48] sm:$0xff]
      %v240 = vld [vmem:[%s212 + $0x50] sm:$0xf]
      %v241 = vld [vmem:[%s212 + $0x54] sm:$0xff]
      %v242 = vld [vmem:[%s212 + $0x5c] sm:$0xf]
      %v243 = vld [vmem:[%s1] sm:$0xf]
      %v244 = vld [vmem:[%s1 + $0x4] sm:$0xf]
      %v245 = vld [vmem:[%s1 + $0x8] sm:$0xf]
      %v246 = vld [vmem:[%s1 + $0xc] sm:$0xf]
      %v247 = vld [vmem:[%s1 + $0x10] sm:$0xf]
      %v248 = vld [vmem:[%s1 + $0x14] sm:$0xf]
      %v249 = vld [vmem:[%s1 + $0x18] sm:$0xf]
      %v250 = vld [vmem:[%s1 + $0x1c] sm:$0xf]
      %v251 = vld [vmem:[%s1 + $0x20] sm:$0xf]
      %v252 = vld [vmem:[%s1 + $0x24] sm:$0xf]
      %v253 = vld [vmem:[%s1 + $0x28] sm:$0xf]
      %v254 = vld [vmem:[%s1 + $0x2c] sm:$0xf]
      %v255 = vld [vmem:[%s1 + $0x30] sm:$0xf]
      %v256 = vld [vmem:[%s1 + $0x34] sm:$0xf]
      %v257 = vld [vmem:[%s1 + $0x38] sm:$0xf]
      %v258 = vld [vmem:[%s1 + $0x3c] sm:$0xf]
      %v259 = vld [vmem:[%s1 + $0x40] sm:$0xf]
      %v260 = vld [vmem:[%s1 + $0x44] sm:$0xf]
      %v261 = vld [vmem:[%s1 + $0x48] sm:$0xf]
      %v262 = vld [vmem:[%s1 + $0x4c] sm:$0xf]
      %v263 = vld [vmem:[%s1 + $0x50] sm:$0xf]
      %v264 = vld [vmem:[%s1 + $0x54] sm:$0xf]
      %v265 = vld [vmem:[%s1 + $0x58] sm:$0xf]
      %v266 = vld [vmem:[%s1 + $0x5c] sm:$0xf]
      %v267 = vld [vmem:[%s1 + $0x60] sm:$0xf]
      %v268 = vld [vmem:[%s1 + $0x64] sm:$0xf]
      %v269 = vld [vmem:[%s1 + $0x68] sm:$0xf]
      %v270 = vld [vmem:[%s1 + $0x6c] sm:$0xf]
      %v271 = vld [vmem:[%s1 + $0x70] sm:$0xf]
      %v272 = vld [vmem:[%s1 + $0x74] sm:$0xf]
      %v273 = vld [vmem:[%s1 + $0x78] sm:$0xf]
      %v274 = vld [vmem:[%s1 + $0x7c] sm:$0xf]
      %v275 = vld [vmem:[%s1 + $0x80] sm:$0xf]
      %v276 = vld [vmem:[%s1 + $0x84] sm:$0xf]
      %v277 = vld [vmem:[%s1 + $0x88] sm:$0xf]
      %v278 = vld [vmem:[%s1 + $0x8c] sm:$0xf]
      %v279 = vld [vmem:[%s2] sm:$0x1]
      %v281 = vlaneseq
      %v282 = vshrl.u32 %v281, 7
      %v283 = vsub.s32 0, %v282
      %v284 = vrot.slane %v279, %v283
      %v302 = vunpack.c.l.b16 %v227
      %v303 = vunpack.c.h.b16 %v227
      %v304 = vunpack.c.l.b16 %v228
      %v305 = vunpack.c.l.b16 %v229
      %v306 = vunpack.c.h.b16 %v229
      %v307 = vunpack.c.l.b16 %v230
      %v308 = vunpack.c.l.b16 %v231
      %v309 = vunpack.c.h.b16 %v231
      %v310 = vunpack.c.l.b16 %v232
      %v311 = vunpack.c.l.b16 %v233
      %v312 = vunpack.c.h.b16 %v233
      %v313 = vunpack.c.l.b16 %v234
      %v314 = vunpack.c.l.b16 %v235
      %v315 = vunpack.c.h.b16 %v235
      %v316 = vunpack.c.l.b16 %v236
      %v317 = vunpack.c.l.b16 %v237
      %v318 = vunpack.c.h.b16 %v237
      %v319 = vunpack.c.l.b16 %v238
      %v320 = vunpack.c.l.b16 %v239
      %v321 = vunpack.c.h.b16 %v239
      %v322 = vunpack.c.l.b16 %v240
      %v323 = vunpack.c.l.b16 %v241
      %v324 = vunpack.c.h.b16 %v241
      %v325 = vunpack.c.l.b16 %v242
      %v326 = vpack.c.b16 %v305, %v302
      %v327 = vpack.c.b16 %v306, %v303
      %v328 = vpack.c.b16 %v307, %v304
      %v329 = vpack.c.b16 %v311, %v308
      %v330 = vpack.c.b16 %v312, %v309
      %v331 = vpack.c.b16 %v313, %v310
      %v332 = vpack.c.b16 %v317, %v314
      %v333 = vpack.c.b16 %v318, %v315
      %v334 = vpack.c.b16 %v319, %v316
      %v335 = vpack.c.b16 %v323, %v320
      %v336 = vpack.c.b16 %v324, %v321
      %v337 = vpack.c.b16 %v325, %v322
      %v382 = vunpack.c.l.b16 %v243
      %v383 = vunpack.c.l.b16 %v244
      %v384 = vunpack.c.l.b16 %v245
      %v385 = vunpack.c.l.b16 %v246
      %v386 = vunpack.c.l.b16 %v247
      %v387 = vunpack.c.l.b16 %v248
      %v388 = vunpack.c.l.b16 %v249
      %v389 = vunpack.c.l.b16 %v250
      %v390 = vunpack.c.l.b16 %v251
      %v391 = vunpack.c.l.b16 %v252
      %v392 = vunpack.c.l.b16 %v253
      %v393 = vunpack.c.l.b16 %v254
      %v394 = vunpack.c.l.b16 %v255
      %v395 = vunpack.c.l.b16 %v256
      %v396 = vunpack.c.l.b16 %v257
      %v397 = vunpack.c.l.b16 %v258
      %v398 = vunpack.c.l.b16 %v259
      %v399 = vunpack.c.l.b16 %v260
      %v400 = vunpack.c.l.b16 %v261
      %v401 = vunpack.c.l.b16 %v262
      %v402 = vunpack.c.l.b16 %v263
      %v403 = vunpack.c.l.b16 %v264
      %v404 = vunpack.c.l.b16 %v265
      %v405 = vunpack.c.l.b16 %v266
      %v406 = vunpack.c.l.b16 %v267
      %v407 = vunpack.c.l.b16 %v268
      %v408 = vunpack.c.l.b16 %v269
      %v409 = vunpack.c.l.b16 %v270
      %v410 = vunpack.c.l.b16 %v271
      %v411 = vunpack.c.l.b16 %v272
      %v412 = vunpack.c.l.b16 %v273
      %v413 = vunpack.c.l.b16 %v274
      %v414 = vunpack.c.l.b16 %v275
      %v415 = vunpack.c.l.b16 %v276
      %v416 = vunpack.c.l.b16 %v277
      %v417 = vunpack.c.l.b16 %v278
      %v418 = vpack.c.b16 %v383, %v382
      %v419 = vpack.c.b16 %v385, %v384
      %v420 = vpack.c.b16 %v387, %v386
      %v421 = vpack.c.b16 %v389, %v388
      %v422 = vpack.c.b16 %v391, %v390
      %v423 = vpack.c.b16 %v393, %v392
      %v424 = vpack.c.b16 %v395, %v394
      %v425 = vpack.c.b16 %v397, %v396
      %v426 = vpack.c.b16 %v399, %v398
      %v427 = vpack.c.b16 %v401, %v400
      %v428 = vpack.c.b16 %v403, %v402
      %v429 = vpack.c.b16 %v405, %v404
      %v430 = vpack.c.b16 %v407, %v406
      %v431 = vpack.c.b16 %v409, %v408
      %v432 = vpack.c.b16 %v411, %v410
      %v433 = vpack.c.b16 %v413, %v412
      %v434 = vpack.c.b16 %v415, %v414
      %v435 = vpack.c.b16 %v417, %v416
      %vm454 = vcmask 261120
      %v456 = vsel %vm454, %v328, 0
      %v459 = vsel %vm454, %v331, 0
      %v462 = vsel %vm454, %v334, 0
      %v465 = vsel %vm454, %v337, 0
      %467 = vmatprep.subr.bf16.mxu0 0
      %468 = vmatpush1.bf16.msra.mxu0 %v418
      %469 = vmatprep.subr.bf16.mxu0 0
      %470 = vmatpush1.bf16.msra.mxu0 %v419
      %471 = vmatprep.subr.bf16.mxu0 0
      %472 = vmatpush1.bf16.msra.mxu0 %v420
      %473 = vmatprep.subr.bf16.mxu0 0
      %474 = vmatpush1.bf16.msra.mxu0 %v421
      %475 = vmatprep.subr.bf16.mxu0 0
      %476 = vmatpush1.bf16.msra.mxu0 %v422
      %477 = vmatprep.subr.bf16.mxu0 0
      %478 = vmatpush1.bf16.msra.mxu0 %v423
      %479 = vmatprep.subr.bf16.mxu0 0
      %480 = vmatpush1.bf16.msra.mxu0 %v424
      %481 = vmatprep.subr.bf16.mxu0 0
      %482 = vmatpush1.bf16.msra.mxu0 %v425
      %483 = vmatprep.subr.bf16.mxu0 0
      %484 = vmatpush1.bf16.msra.mxu0 %v426
      %485 = vmatprep.subr.bf16.mxu0 0
      %486 = vmatpush1.bf16.msra.mxu0 %v427
      %487 = vmatprep.subr.bf16.mxu0 0
      %488 = vmatpush1.bf16.msra.mxu0 %v428
      %489 = vmatprep.subr.bf16.mxu0 0
      %490 = vmatpush1.bf16.msra.mxu0 %v429
      %491 = vmatprep.subr.bf16.mxu0 0
      %492 = vmatpush1.bf16.msra.mxu0 %v430
      %493 = vmatprep.subr.bf16.mxu0 0
      %494 = vmatpush1.bf16.msra.mxu0 %v431
      %495 = vmatprep.subr.bf16.mxu0 0
      %496 = vmatpush1.bf16.msra.mxu0 %v432
      %497 = vmatprep.subr.bf16.mxu0 0
      %498 = vmatpush1.bf16.msra.mxu0 %v433
      %499 = vmatprep.mubr.bf16.mxu0 %v327
      %500 = vmatmul.mubr.bf16.gmra.mrb[0].mxu0 %v326
      %v501 = vpop.f32.mrb[0].mxu0
      %v502 = vadd.f32 %v284, %v501
      %v503 = vpop.f32.mrb[0].mxu0
      %v504 = vpop.f32.mrb[0].mxu0
      %v505 = vadd.f32 %v284, %v504
      %v506 = vpop.f32.mrb[0].mxu0
      %507 = vmatprep.mubr.bf16.mxu0 %v330
      %508 = vmatmul.mubr.bf16.gmra.mrb[0].mxu0 %v329
      %v509 = vpop.f32.mrb[0].mxu0
      %v510 = vadd.f32 %v284, %v509
      %v511 = vpop.f32.mrb[0].mxu0
      %v512 = vpop.f32.mrb[0].mxu0
      %v513 = vadd.f32 %v284, %v512
      %v514 = vpop.f32.mrb[0].mxu0
      %515 = vmatprep.mubr.bf16.mxu0 %v333
      %516 = vmatmul.mubr.bf16.gmra.mrb[0].mxu0 %v332
      %v517 = vpop.f32.mrb[0].mxu0
      %v518 = vadd.f32 %v284, %v517
      %v519 = vpop.f32.mrb[0].mxu0
      %v520 = vpop.f32.mrb[0].mxu0
      %v521 = vadd.f32 %v284, %v520
      %v522 = vpop.f32.mrb[0].mxu0
      %523 = vmatprep.mubr.bf16.mxu0 %v336
      %524 = vmatmul.mubr.bf16.gmra.mrb[0].mxu0 %v335
      %v525 = vpop.f32.mrb[0].mxu0
      %v526 = vadd.f32 %v284, %v525
      %v527 = vpop.f32.mrb[0].mxu0
      %v528 = vpop.f32.mrb[0].mxu0
      %v529 = vadd.f32 %v284, %v528
      %v530 = vpop.f32.mrb[0].mxu0
      %531 = vdwg.mxu0
      %532 = vmatprep.subr.bf16.mxu0 0
      %533 = vmatpush1.bf16.msra.mxu0 %v434
      %534 = vmatprep.subr.bf16.mxu0 0
      %535 = vmatpush1.bf16.msra.mxu0 %v435
      %536 = vmatprep.subr.bf16.mxu0 0
      %537 = vmatpush1.bf16.msra.mxu0 0
      %538 = vmatprep.subr.bf16.mxu0 0
      %539 = vmatpush1.bf16.msra.mxu0 0
      %540 = vmatprep.subr.bf16.mxu0 0
      %541 = vmatpush1.bf16.msra.mxu0 0
      %542 = vmatprep.subr.bf16.mxu0 0
      %543 = vmatpush1.bf16.msra.mxu0 0
      %544 = vmatprep.subr.bf16.mxu0 0
      %545 = vmatpush1.bf16.msra.mxu0 0
      %546 = vmatprep.subr.bf16.mxu0 0
      %547 = vmatpush1.bf16.msra.mxu0 0
      %548 = vmatprep.subr.bf16.mxu0 0
      %549 = vmatpush1.bf16.msra.mxu0 0
      %550 = vmatprep.subr.bf16.mxu0 0
      %551 = vmatpush1.bf16.msra.mxu0 0
      %552 = vmatprep.subr.bf16.mxu0 0
      %553 = vmatpush1.bf16.msra.mxu0 0
      %554 = vmatprep.subr.bf16.mxu0 0
      %555 = vmatpush1.bf16.msra.mxu0 0
      %556 = vmatprep.subr.bf16.mxu0 0
      %557 = vmatpush1.bf16.msra.mxu0 0
      %558 = vmatprep.subr.bf16.mxu0 0
      %559 = vmatpush1.bf16.msra.mxu0 0
      %560 = vmatprep.subr.bf16.mxu0 0
      %561 = vmatpush1.bf16.msra.mxu0 0
      %562 = vmatprep.subr.bf16.mxu0 0
      %563 = vmatpush1.bf16.msra.mxu0 0
      %564 = vmatprep.mubr.bf16.mxu0 0
      %565 = vmatmul.mubr.bf16.gmra.mrb[0].mxu0 %v456
      %v566 = vpop.f32.mrb[0].mxu0
      %v567 = vadd.f32 %v502, %v566
      %v568 = vpop.f32.mrb[0].mxu0
      %v569 = vpop.f32.mrb[0].mxu0
      %v570 = vadd.f32 %v505, %v569
      %v571 = vpop.f32.mrb[0].mxu0
      %572 = vmatprep.mubr.bf16.mxu0 0
      %573 = vmatmul.mubr.bf16.gmra.mrb[0].mxu0 %v459
      %v574 = vpop.f32.mrb[0].mxu0
      %v575 = vadd.f32 %v510, %v574
      %v576 = vpop.f32.mrb[0].mxu0
      %v577 = vpop.f32.mrb[0].mxu0
      %v578 = vadd.f32 %v513, %v577
      %v579 = vpop.f32.mrb[0].mxu0
      %580 = vmatprep.mubr.bf16.mxu0 0
      %581 = vmatmul.mubr.bf16.gmra.mrb[0].mxu0 %v462
      %v582 = vpop.f32.mrb[0].mxu0
      %v583 = vadd.f32 %v518, %v582
      %v584 = vpop.f32.mrb[0].mxu0
      %v585 = vpop.f32.mrb[0].mxu0
      %v586 = vadd.f32 %v521, %v585
      %v587 = vpop.f32.mrb[0].mxu0
      %588 = vmatprep.mubr.bf16.mxu0 0
      %589 = vmatmul.mubr.bf16.gmra.mrb[0].mxu0 %v465
      %v590 = vpop.f32.mrb[0].mxu0
      %v591 = vadd.f32 %v526, %v590
      %v592 = vpop.f32.mrb[0].mxu0
      %v593 = vpop.f32.mrb[0].mxu0
      %v594 = vadd.f32 %v529, %v593
      %v595 = vpop.f32.mrb[0].mxu0
      %596 = vdwg.mxu0
      %v597 = vld [vmem:[%s218] sm:$0xf]
      %v598 = vld [vmem:[%s218 + $0x4] sm:$0xf]
      %v599 = vld [vmem:[%s218 + $0x8] sm:$0xf]
      %v600 = vld [vmem:[%s218 + $0xc] sm:$0xf]
      %v601 = vld [vmem:[%s218 + $0x10] sm:$0xf]
      %v602 = vld [vmem:[%s218 + $0x14] sm:$0xf]
      %v603 = vld [vmem:[%s218 + $0x18] sm:$0xf]
      %v604 = vld [vmem:[%s218 + $0x1c] sm:$0xf]
      %v605 = vunpack.c.l.bf16 %v597
      %v606 = vunpack.c.l.bf16 %v598
      %v607 = vunpack.c.l.bf16 %v599
      %v608 = vunpack.c.l.bf16 %v600
      %v609 = vunpack.c.l.bf16 %v601
      %v610 = vunpack.c.l.bf16 %v602
      %v611 = vunpack.c.l.bf16 %v603
      %v612 = vunpack.c.l.bf16 %v604
      %v613 = vadd.f32 %v567, %v605
      %v614 = vadd.f32 %v570, %v606
      %v615 = vadd.f32 %v575, %v607
      %v616 = vadd.f32 %v578, %v608
      %v617 = vadd.f32 %v583, %v609
      %v618 = vadd.f32 %v586, %v610
      %v619 = vadd.f32 %v591, %v611
      %v620 = vadd.f32 %v594, %v612
      %v621 = vmax.f32 %v613, 0.0
      %v622 = vmax.f32 %v614, 0.0
      %v623 = vmax.f32 %v615, 0.0
      %v624 = vmax.f32 %v616, 0.0
      %v625 = vmax.f32 %v617, 0.0
      %v626 = vmax.f32 %v618, 0.0
      %v627 = vmax.f32 %v619, 0.0
      %v628 = vmax.f32 %v620, 0.0
      %v629 = vpack.c.bf16 %v622, %v621
      %v630 = vpack.c.bf16 %v624, %v623
      %v631 = vpack.c.bf16 %v626, %v625
      %v632 = vpack.c.bf16 %v628, %v627
      %v637 = vunpack.c.l.b16 %v629
      %v638 = vunpack.c.h.b16 %v629
      %v639 = vunpack.c.l.b16 %v630
      %v640 = vunpack.c.h.b16 %v630
      %v641 = vunpack.c.l.b16 %v631
      %v642 = vunpack.c.h.b16 %v631
      %v643 = vunpack.c.l.b16 %v632
      %v644 = vunpack.c.h.b16 %v632
      %v645 = vpack.c.b16 %v637, %v637
      %v646 = vpack.c.b16 %v638, %v638
      %v647 = vpack.c.b16 %v639, %v639
      %v648 = vpack.c.b16 %v640, %v640
      %v649 = vpack.c.b16 %v641, %v641
      %v650 = vpack.c.b16 %v642, %v642
      %v651 = vpack.c.b16 %v643, %v643
      %v652 = vpack.c.b16 %v644, %v644
      %vm661 = vcmask 257024
      %662 = vst.msk [vmem:[%s224] sm:$0xf] %vm661, %v645
      %663 = vst.msk [vmem:[%s224 + $0x4] sm:$0xf] %vm661, %v646
      %664 = vst.msk [vmem:[%s224 + $0x8] sm:$0xf] %vm661, %v647
      %665 = vst.msk [vmem:[%s224 + $0xc] sm:$0xf] %vm661, %v648
      %666 = vst.msk [vmem:[%s224 + $0x10] sm:$0xf] %vm661, %v649
      %667 = vst.msk [vmem:[%s224 + $0x14] sm:$0xf] %vm661, %v650
      %668 = vst.msk [vmem:[%s224 + $0x18] sm:$0xf] %vm661, %v651
      %669 = vst.msk [vmem:[%s224 + $0x1c] sm:$0xf] %vm661, %v652
      %s670 = smul.u32 8, %s15
      %p671 = scmp.lt.s32.totalorder %s670, 15
      %s672 = scalar_select %p671, %s670, 15
      %s673 = smul.addr %s672, 4
      %s674 = scalar_lea.vmem %s4, %s673
      // Predicated region
      $region37: #{tree_forward.8} parent=35 // pred_check
        %p675 = pneg %p127
      $region38: #{tree_forward.8} parent=35 // pred_check_branch
        %677 = sbr.rel (%p675) target = $region40
      $region39: #{tree_forward.8} parent=35 // pred_region
        %s678 = smul.u32 8, %s15
      $region40: #{tree_forward.8} parent=35 // pred_fallthru
        _
    $region36: #{tree_forward.8} parent=5 // pred_fallthru
      _
    %p679 = scmp.le.s32.totalorder 2, %s10
    // Predicated region
    $region41: #{tree_forward.8} parent=5 // pred_check
      %p680 = pneg %p679
    $region42: #{tree_forward.8} parent=5 // pred_check_branch
      %682 = sbr.rel (%p680) target = $region44
    $region43: #{tree_forward.8} parent=5 // pred_region
      %s683 = ssub.s32 %s10, 2
      // Predicated region
      $region45: #{tree_forward.8} parent=43 // pred_check
        %p684 = pneg %p133
      $region46: #{tree_forward.8} parent=43 // pred_check_branch
        %686 = sbr.rel (%p684) target = $region48
      $region47: #{tree_forward.8} parent=43 // pred_region
        %s687 = smul.u32 8, %s16
        %p688 = scmp.lt.s32.totalorder %s687, 15
        %s689 = scalar_select %p688, %s687, 15
        %s690 = smul.addr %s689, 4
        %s691 = scalar_lea.vmem %s4, %s690
      $region48: #{tree_forward.8} parent=43 // pred_fallthru
        _
    $region44: #{tree_forward.8} parent=5 // pred_fallthru
      _
  $region6: #{tree_forward.8} parent=0 // loop_footer
    %s14 = sadd.s32 1, %s10
  $region7: #{tree_forward.8} parent=0 // loop_footer_branch
    %9 = sbr.rel target = $region3
  $region8: #{tree_forward.8} parent=0 // loop_exit
    _

// kernel: tree_forward.9
$region0: #{tree_forward.9}
  #allocation0 [shape = 'u32[]', space=smem, size = 0x4, offset = 0x4, fixed_abs, tag = 'smem constant byte address 0x4 - core index']
  #allocation1 [shape = 'u32[144,128]{1,0:T(1,128)}', space=vmem, size = 0x12000, scoped, tag = 'internal scratch']
  %s0 = inlined_call_operand.vmem [shape: bf16[128,288], index: 0, kind: input, shape index: {}]
  %s1 = inlined_call_operand.vmem [shape: bf16[288,32], index: 1, kind: input, shape index: {}]
  %s2 = inlined_call_operand.vmem [shape: f32[1,32], index: 2, kind: input, shape index: {}]
  %s3 = inlined_call_operand.vmem [shape: bf16[128,32], index: 3, kind: output, shape index: {}]
  %s4 = sld [smem:[#allocation0]]
  $region45: #{tree_forward.9} parent=0
    _
  %s6 = ssub.s32 1, %s4
  %s7 = scalar_select 0, %s6, %s4
  loop: start=0, step=1, limit=4
  $region2: #{tree_forward.9} parent=0 // loop_pre_header
    _
  $region3: #{tree_forward.9} parent=0 // loop_header
    %s9 = sphi 0, %s13
    %p10 = scmp.ge.s32.totalorder %s9, 4
    %s19 = sphi 0, %s21
    %s22 = sphi 0, %s19
    %s23 = sphi 0, %s22
    %s39 = sphi 0, %s23
    %s43 = sphi 0, %s43
    %s45 = sphi 0, %s43
    %s46 = sphi 0, %s45
    %s60 = sphi 0, %s46
    %s64 = sphi 0, %s64
    %s66 = sphi 0, %s64
    %s67 = sphi 0, %s66
    %s81 = sphi 0, %s67
    %s87 = sphi 0, %s89
    %s90 = sphi 0, %s87
    %s91 = sphi 0, %s90
    %s107 = sphi 0, %s91
  $region4: #{tree_forward.9} parent=0 // loop_header_branch
    %12 = sbr.rel (%p10) target = $region8
  $region5: #{tree_forward.9} parent=0 // loop_body
    %s14 = ssub.s32 %s9, 1
    %s15 = ssub.s32 %s9, 2
    %s16 = sadd.s32 %s9, 1
    %s17 = ssub.s32 %s9, %s16
    %p18 = scmp.eq.s32.totalorder %s17, 0
    %s20 = sadd.s32 %s19, 1
    %s21 = scalar_select %p18, %s19, %s20
    %p24 = pneg %p18
    %p25 = scmp.eq.s32.totalorder %s9, 1
    %p26 = por %p24, %p25
    %p27 = scmp.ne.s32.totalorder %s19, %s22
    %p28 = scmp.eq.s32.totalorder %s9, 0
    %p29 = por %p27, %p28
    %p30 = scmp.ne.s32.totalorder %s19, %s22
    %p31 = scmp.eq.s32.totalorder %s14, 1
    %p32 = por %p30, %p31
    %p33 = scmp.ne.s32.totalorder %s22, %s23
    %p34 = scmp.eq.s32.totalorder %s14, 0
    %p35 = por %p33, %p34
    %p36 = scmp.ne.s32.totalorder %s22, %s23
    %p37 = scmp.eq.s32.totalorder %s15, 1
    %p38 = por %p36, %p37
    %p40 = scmp.ne.s32.totalorder %s23, %s39
    %p41 = scmp.eq.s32.totalorder %s15, 0
    %p42 = por %p40, %p41
    %s44 = sadd.s32 %s43, 1
    %p47 = scmp.eq.s32.totalorder %s9, 1
    %p48 = scmp.ne.s32.totalorder %s43, %s45
    %p49 = scmp.eq.s32.totalorder %s9, 0
    %p50 = por %p48, %p49
    %p51 = scmp.ne.s32.totalorder %s43, %s45
    %p52 = scmp.eq.s32.totalorder %s14, 1
    %p53 = por %p51, %p52
    %p54 = scmp.ne.s32.totalorder %s45, %s46
    %p55 = scmp.eq.s32.totalorder %s14, 0
    %p56 = por %p54, %p55
    %p57 = scmp.ne.s32.totalorder %s45, %s46
    %p58 = scmp.eq.s32.totalorder %s15, 1
    %p59 = por %p57, %p58
    %p61 = scmp.ne.s32.totalorder %s46, %s60
    %p62 = scmp.eq.s32.totalorder %s15, 0
    %p63 = por %p61, %p62
    %s65 = sadd.s32 %s64, 1
    %p68 = scmp.eq.s32.totalorder %s9, 1
    %p69 = scmp.ne.s32.totalorder %s64, %s66
    %p70 = scmp.eq.s32.totalorder %s9, 0
    %p71 = por %p69, %p70
    %p72 = scmp.ne.s32.totalorder %s64, %s66
    %p73 = scmp.eq.s32.totalorder %s14, 1
    %p74 = por %p72, %p73
    %p75 = scmp.ne.s32.totalorder %s66, %s67
    %p76 = scmp.eq.s32.totalorder %s14, 0
    %p77 = por %p75, %p76
    %p78 = scmp.ne.s32.totalorder %s66, %s67
    %p79 = scmp.eq.s32.totalorder %s15, 1
    %p80 = por %p78, %p79
    %p82 = scmp.ne.s32.totalorder %s67, %s81
    %p83 = scmp.eq.s32.totalorder %s15, 0
    %p84 = por %p82, %p83
    %s85 = ssub.s32 %s9, %s16
    %p86 = scmp.eq.s32.totalorder %s85, 0
    %s88 = sadd.s32 %s87, 1
    %s89 = scalar_select %p86, %s87, %s88
    %p92 = pneg %p86
    %p93 = scmp.eq.s32.totalorder %s9, 1
    %p94 = por %p92, %p93
    %p95 = scmp.ne.s32.totalorder %s87, %s90
    %p96 = scmp.eq.s32.totalorder %s9, 0
    %p97 = por %p95, %p96
    %p98 = scmp.ne.s32.totalorder %s87, %s90
    %p99 = scmp.eq.s32.totalorder %s14, 1
    %p100 = por %p98, %p99
    %p101 = scmp.ne.s32.totalorder %s90, %s91
    %p102 = scmp.eq.s32.totalorder %s14, 0
    %p103 = por %p101, %p102
    %p104 = scmp.ne.s32.totalorder %s90, %s91
    %p105 = scmp.eq.s32.totalorder %s15, 1
    %p106 = por %p104, %p105
    %p108 = scmp.ne.s32.totalorder %s91, %s107
    %p109 = scmp.eq.s32.totalorder %s15, 0
    %p110 = por %p108, %p109
    %p111 = scmp.le.s32.totalorder 1, %s9
    %p112 = scmp.lt.s32.totalorder %s9, 3
    %p113 = pnand %p111, %p112
    %p114 = pneg %p113
    // Predicated region
    $region9: #{tree_forward.9} parent=5 // pred_check
      _
    $region10: #{tree_forward.9} parent=5 // pred_check_branch
      %116 = sbr.rel (%p113) target = $region12
    $region11: #{tree_forward.9} parent=5 // pred_region
      %s117 = ssub.s32 %s9, 1
      // Predicated region
      $region13: #{tree_forward.9} parent=11 // pred_check
        %p118 = pneg %p56
      $region14: #{tree_forward.9} parent=11 // pred_check_branch
        %120 = sbr.rel (%p118) target = $region16
      $region15: #{tree_forward.9} parent=11 // pred_region
        _
      $region16: #{tree_forward.9} parent=11 // pred_fallthru
        _
      // Predicated region
      $region17: #{tree_forward.9} parent=11 // pred_check
        %p121 = pneg %p77
      $region18: #{tree_forward.9} parent=11 // pred_check_branch
        %123 = sbr.rel (%p121) target = $region20
      $region19: #{tree_forward.9} parent=11 // pred_region
        _
      $region20: #{tree_forward.9} parent=11 // pred_fallthru
        _
    $region12: #{tree_forward.9} parent=5 // pred_fallthru
      _
    %p124 = scmp.lt.s32.totalorder %s9, 2
    // Predicated region
    $region21: #{tree_forward.9} parent=5 // pred_check
      %p125 = pneg %p124
    $region22: #{tree_forward.9} parent=5 // pred_check_branch
      %127 = sbr.rel (%p125) target = $region24
    $region23: #{tree_forward.9} parent=5 // pred_region
      // Predicated region
      $region25: #{tree_forward.9} parent=23 // pred_check
        %p128 = pneg %p29
      $region26: #{tree_forward.9} parent=23 // pred_check_branch
        %130 = sbr.rel (%p128) target = $region28
      $region27: #{tree_forward.9} parent=23 // pred_region
        %s131 = smul.u32 8, %s9
        %p132 = scmp.lt.s32.totalorder %s131, 15
        %s133 = scalar_select %p132, %s131, 15
        %s134 = smul.addr %s133, 3
        %s135 = smul.addr %s134, 4
        %s136 = scalar_lea.vmem %s0, %s135
        %s137 = smul.u32 8, %s9
      $region28: #{tree_forward.9} parent=23 // pred_fallthru
        _
    $region24: #{tree_forward.9} parent=5 // pred_fallthru
      _
    %p138 = scmp.le.s32.totalorder 1, %s9
    %p139 = scmp.lt.s32.totalorder %s9, 3
    %p140 = pnand %p138, %p139
    %p141 = pneg %p140
    // Predicated region
    $region29: #{tree_forward.9} parent=5 // pred_check
      _
    $region30: #{tree_forward.9} parent=5 // pred_check_branch
      %143 = sbr.rel (%p140) target = $region32
    $region31: #{tree_forward.9} parent=5 // pred_region
      %s144 = ssub.s32 %s9, 1
      %s145 = smul.u32 8, %s14
      %p146 = scmp.lt.s32.totalorder %s145, 15
      %s147 = scalar_select %p146, %s145, 15
      %s148 = smul.addr %s147, 3
      %s149 = smul.addr %s148, 4
      %s150 = scalar_lea.vmem %s0, %s149
      %p151 = pneg %p35
      %p152 = pneg %p32
      %p153 = pneg %p56
      %p154 = pneg %p53
      %p155 = pneg %p77
      %p156 = pneg %p74
      %p157 = pneg %p103
      %p158 = pneg %p100
      %s159 = smul.u32 8, %s14
      %p160 = scmp.lt.s32.totalorder %s159, 15
      %s161 = scalar_select %p160, %s159, 15
      %s162 = smul.addr %s161, 4
      %s163 = scalar_lea.vmem %s3, %s162
      %s164 = smul.u32 8, %s14
      %p165 = scmp.lt.s32.totalorder %s164, 15
      %s166 = scalar_select %p165, %s164, 15
      %s167 = smul.addr %s166, 3
      %s168 = smul.addr %s167, 4
      %s169 = scalar_lea.vmem %s0, %s168
      %s170 = smul.u32 8, %s14
      %s171 = smul.u32 8, %s14
      %p172 = scmp.lt.s32.totalorder %s171, 15
      %s173 = scalar_select %p172, %s171, 15
      %s174 = smul.addr %s173, 4
      %s175 = scalar_lea.vmem %s3, %s174
      %s176 = smul.u32 8, %s14
      %v178 = vld [vmem:[%s169] sm:$0xff]
      %v179 = vld [vmem:[%s169 + $0x8] sm:$0xf]
      %v180 = vld [vmem:[%s169 + $0xc] sm:$0xff]
      %v181 = vld [vmem:[%s169 + $0x14] sm:$0xf]
      %v182 = vld [vmem:[%s169 + $0x18] sm:$0xff]
      %v183 = vld [vmem:[%s169 + $0x20] sm:$0xf]
      %v184 = vld [vmem:[%s169 + $0x24] sm:$0xff]
      %v185 = vld [vmem:[%s169 + $0x2c] sm:$0xf]
      %v186 = vld [vmem:[%s169 + $0x30] sm:$0xff]
      %v187 = vld [vmem:[%s169 + $0x38] sm:$0xf]
      %v188 = vld [vmem:[%s169 + $0x3c] sm:$0xff]
      %v189 = vld [vmem:[%s169 + $0x44] sm:$0xf]
      %v190 = vld [vmem:[%s169 + $0x48] sm:$0xff]
      %v191 = vld [vmem:[%s169 + $0x50] sm:$0xf]
      %v192 = vld [vmem:[%s169 + $0x54] sm:$0xff]
      %v193 = vld [vmem:[%s169 + $0x5c] sm:$0xf]
      %v194 = vld [vmem:[%s1] sm:$0xf]
      %v195 = vld [vmem:[%s1 + $0x4] sm:$0xf]
      %v196 = vld [vmem:[%s1 + $0x8] sm:$0xf]
      %v197 = vld [vmem:[%s1 + $0xc] sm:$0xf]
      %v198 = vld [vmem:[%s1 + $0x10] sm:$0xf]
      %v199 = vld [vmem:[%s1 + $0x14] sm:$0xf]
      %v200 = vld [vmem:[%s1 + $0x18] sm:$0xf]
      %v201 = vld [vmem:[%s1 + $0x1c] sm:$0xf]
      %v202 = vld [vmem:[%s1 + $0x20] sm:$0xf]
      %v203 = vld [vmem:[%s1 + $0x24] sm:$0xf]
      %v204 = vld [vmem:[%s1 + $0x28] sm:$0xf]
      %v205 = vld [vmem:[%s1 + $0x2c] sm:$0xf]
      %v206 = vld [vmem:[%s1 + $0x30] sm:$0xf]
      %v207 = vld [vmem:[%s1 + $0x34] sm:$0xf]
      %v208 = vld [vmem:[%s1 + $0x38] sm:$0xf]
      %v209 = vld [vmem:[%s1 + $0x3c] sm:$0xf]
      %v210 = vld [vmem:[%s1 + $0x40] sm:$0xf]
      %v211 = vld [vmem:[%s1 + $0x44] sm:$0xf]
      %v212 = vld [vmem:[%s1 + $0x48] sm:$0xf]
      %v213 = vld [vmem:[%s1 + $0x4c] sm:$0xf]
      %v214 = vld [vmem:[%s1 + $0x50] sm:$0xf]
      %v215 = vld [vmem:[%s1 + $0x54] sm:$0xf]
      %v216 = vld [vmem:[%s1 + $0x58] sm:$0xf]
      %v217 = vld [vmem:[%s1 + $0x5c] sm:$0xf]
      %v218 = vld [vmem:[%s1 + $0x60] sm:$0xf]
      %v219 = vld [vmem:[%s1 + $0x64] sm:$0xf]
      %v220 = vld [vmem:[%s1 + $0x68] sm:$0xf]
      %v221 = vld [vmem:[%s1 + $0x6c] sm:$0xf]
      %v222 = vld [vmem:[%s1 + $0x70] sm:$0xf]
      %v223 = vld [vmem:[%s1 + $0x74] sm:$0xf]
      %v224 = vld [vmem:[%s1 + $0x78] sm:$0xf]
      %v225 = vld [vmem:[%s1 + $0x7c] sm:$0xf]
      %v226 = vld [vmem:[%s1 + $0x80] sm:$0xf]
      %v227 = vld [vmem:[%s1 + $0x84] sm:$0xf]
      %v228 = vld [vmem:[%s1 + $0x88] sm:$0xf]
      %v229 = vld [vmem:[%s1 + $0x8c] sm:$0xf]
      %v230 = vld [vmem:[%s2] sm:$0x1]
      %v232 = vlaneseq
      %v233 = vshrl.u32 %v232, 7
      %v234 = vsub.s32 0, %v233
      %v235 = vrot.slane %v230, %v234
      %v253 = vunpack.c.l.b16 %v178
      %v254 = vunpack.c.h.b16 %v178
      %v255 = vunpack.c.l.b16 %v179
      %v256 = vunpack.c.l.b16 %v180
      %v257 = vunpack.c.h.b16 %v180
      %v258 = vunpack.c.l.b16 %v181
      %v259 = vunpack.c.l.b16 %v182
      %v260 = vunpack.c.h.b16 %v182
      %v261 = vunpack.c.l.b16 %v183
      %v262 = vunpack.c.l.b16 %v184
      %v263 = vunpack.c.h.b16 %v184
      %v264 = vunpack.c.l.b16 %v185
      %v265 = vunpack.c.l.b16 %v186
      %v266 = vunpack.c.h.b16 %v186
      %v267 = vunpack.c.l.b16 %v187
      %v268 = vunpack.c.l.b16 %v188
      %v269 = vunpack.c.h.b16 %v188
      %v270 = vunpack.c.l.b16 %v189
      %v271 = vunpack.c.l.b16 %v190
      %v272 = vunpack.c.h.b16 %v190
      %v273 = vunpack.c.l.b16 %v191
      %v274 = vunpack.c.l.b16 %v192
      %v275 = vunpack.c.h.b16 %v192
      %v276 = vunpack.c.l.b16 %v193
      %v277 = vpack.c.b16 %v256, %v253
      %v278 = vpack.c.b16 %v257, %v254
      %v279 = vpack.c.b16 %v258, %v255
      %v280 = vpack.c.b16 %v262, %v259
      %v281 = vpack.c.b16 %v263, %v260
      %v282 = vpack.c.b16 %v264, %v261
      %v283 = vpack.c.b16 %v268, %v265
      %v284 = vpack.c.b16 %v269, %v266
      %v285 = vpack.c.b16 %v270, %v267
      %v286 = vpack.c.b16 %v274, %v271
      %v287 = vpack.c.b16 %v275, %v272
      %v288 = vpack.c.b16 %v276, %v273
      %v333 = vunpack.c.l.b16 %v194
      %v334 = vunpack.c.l.b16 %v195
      %v335 = vunpack.c.l.b16 %v196
      %v336 = vunpack.c.l.b16 %v197
      %v337 = vunpack.c.l.b16 %v198
      %v338 = vunpack.c.l.b16 %v199
      %v339 = vunpack.c.l.b16 %v200
      %v340 = vunpack.c.l.b16 %v201
      %v341 = vunpack.c.l.b16 %v202
      %v342 = vunpack.c.l.b16 %v203
      %v343 = vunpack.c.l.b16 %v204
      %v344 = vunpack.c.l.b16 %v205
      %v345 = vunpack.c.l.b16 %v206
      %v346 = vunpack.c.l.b16 %v207
      %v347 = vunpack.c.l.b16 %v208
      %v348 = vunpack.c.l.b16 %v209
      %v349 = vunpack.c.l.b16 %v210
      %v350 = vunpack.c.l.b16 %v211
      %v351 = vunpack.c.l.b16 %v212
      %v352 = vunpack.c.l.b16 %v213
      %v353 = vunpack.c.l.b16 %v214
      %v354 = vunpack.c.l.b16 %v215
      %v355 = vunpack.c.l.b16 %v216
      %v356 = vunpack.c.l.b16 %v217
      %v357 = vunpack.c.l.b16 %v218
      %v358 = vunpack.c.l.b16 %v219
      %v359 = vunpack.c.l.b16 %v220
      %v360 = vunpack.c.l.b16 %v221
      %v361 = vunpack.c.l.b16 %v222
      %v362 = vunpack.c.l.b16 %v223
      %v363 = vunpack.c.l.b16 %v224
      %v364 = vunpack.c.l.b16 %v225
      %v365 = vunpack.c.l.b16 %v226
      %v366 = vunpack.c.l.b16 %v227
      %v367 = vunpack.c.l.b16 %v228
      %v368 = vunpack.c.l.b16 %v229
      %v369 = vpack.c.b16 %v334, %v333
      %v370 = vpack.c.b16 %v336, %v335
      %v371 = vpack.c.b16 %v338, %v337
      %v372 = vpack.c.b16 %v340, %v339
      %v373 = vpack.c.b16 %v342, %v341
      %v374 = vpack.c.b16 %v344, %v343
      %v375 = vpack.c.b16 %v346, %v345
      %v376 = vpack.c.b16 %v348, %v347
      %v377 = vpack.c.b16 %v350, %v349
      %v378 = vpack.c.b16 %v352, %v351
      %v379 = vpack.c.b16 %v354, %v353
      %v380 = vpack.c.b16 %v356, %v355
      %v381 = vpack.c.b16 %v358, %v357
      %v382 = vpack.c.b16 %v360, %v359
      %v383 = vpack.c.b16 %v362, %v361
      %v384 = vpack.c.b16 %v364, %v363
      %v385 = vpack.c.b16 %v366, %v365
      %v386 = vpack.c.b16 %v368, %v367
      %vm405 = vcmask 261120
      %v407 = vsel %vm405, %v279, 0
      %v410 = vsel %vm405, %v282, 0
      %v413 = vsel %vm405, %v285, 0
      %v416 = vsel %vm405, %v288, 0
      %418 = vmatprep.subr.bf16.mxu0 0
      %419 = vmatpush1.bf16.msra.mxu0 %v369
      %420 = vmatprep.subr.bf16.mxu0 0
      %421 = vmatpush1.bf16.msra.mxu0 %v370
      %422 = vmatprep.subr.bf16.mxu0 0
      %423 = vmatpush1.bf16.msra.mxu0 %v371
      %424 = vmatprep.subr.bf16.mxu0 0
      %425 = vmatpush1.bf16.msra.mxu0 %v372
      %426 = vmatprep.subr.bf16.mxu0 0
      %427 = vmatpush1.bf16.msra.mxu0 %v373
      %428 = vmatprep.subr.bf16.mxu0 0
      %429 = vmatpush1.bf16.msra.mxu0 %v374
      %430 = vmatprep.subr.bf16.mxu0 0
      %431 = vmatpush1.bf16.msra.mxu0 %v375
      %432 = vmatprep.subr.bf16.mxu0 0
      %433 = vmatpush1.bf16.msra.mxu0 %v376
      %434 = vmatprep.subr.bf16.mxu0 0
      %435 = vmatpush1.bf16.msra.mxu0 %v377
      %436 = vmatprep.subr.bf16.mxu0 0
      %437 = vmatpush1.bf16.msra.mxu0 %v378
      %438 = vmatprep.subr.bf16.mxu0 0
      %439 = vmatpush1.bf16.msra.mxu0 %v379
      %440 = vmatprep.subr.bf16.mxu0 0
      %441 = vmatpush1.bf16.msra.mxu0 %v380
      %442 = vmatprep.subr.bf16.mxu0 0
      %443 = vmatpush1.bf16.msra.mxu0 %v381
      %444 = vmatprep.subr.bf16.mxu0 0
      %445 = vmatpush1.bf16.msra.mxu0 %v382
      %446 = vmatprep.subr.bf16.mxu0 0
      %447 = vmatpush1.bf16.msra.mxu0 %v383
      %448 = vmatprep.subr.bf16.mxu0 0
      %449 = vmatpush1.bf16.msra.mxu0 %v384
      %450 = vmatprep.mubr.bf16.mxu0 %v278
      %451 = vmatmul.mubr.bf16.gmra.mrb[0].mxu0 %v277
      %v452 = vpop.f32.mrb[0].mxu0
      %v453 = vadd.f32 %v235, %v452
      %v454 = vpop.f32.mrb[0].mxu0
      %v455 = vpop.f32.mrb[0].mxu0
      %v456 = vadd.f32 %v235, %v455
      %v457 = vpop.f32.mrb[0].mxu0
      %458 = vmatprep.mubr.bf16.mxu0 %v281
      %459 = vmatmul.mubr.bf16.gmra.mrb[0].mxu0 %v280
      %v460 = vpop.f32.mrb[0].mxu0
      %v461 = vadd.f32 %v235, %v460
      %v462 = vpop.f32.mrb[0].mxu0
      %v463 = vpop.f32.mrb[0].mxu0
      %v464 = vadd.f32 %v235, %v463
      %v465 = vpop.f32.mrb[0].mxu0
      %466 = vmatprep.mubr.bf16.mxu0 %v284
      %467 = vmatmul.mubr.bf16.gmra.mrb[0].mxu0 %v283
      %v468 = vpop.f32.mrb[0].mxu0
      %v469 = vadd.f32 %v235, %v468
      %v470 = vpop.f32.mrb[0].mxu0
      %v471 = vpop.f32.mrb[0].mxu0
      %v472 = vadd.f32 %v235, %v471
      %v473 = vpop.f32.mrb[0].mxu0
      %474 = vmatprep.mubr.bf16.mxu0 %v287
      %475 = vmatmul.mubr.bf16.gmra.mrb[0].mxu0 %v286
      %v476 = vpop.f32.mrb[0].mxu0
      %v477 = vadd.f32 %v235, %v476
      %v478 = vpop.f32.mrb[0].mxu0
      %v479 = vpop.f32.mrb[0].mxu0
      %v480 = vadd.f32 %v235, %v479
      %v481 = vpop.f32.mrb[0].mxu0
      %482 = vdwg.mxu0
      %483 = vmatprep.subr.bf16.mxu0 0
      %484 = vmatpush1.bf16.msra.mxu0 %v385
      %485 = vmatprep.subr.bf16.mxu0 0
      %486 = vmatpush1.bf16.msra.mxu0 %v386
      %487 = vmatprep.subr.bf16.mxu0 0
      %488 = vmatpush1.bf16.msra.mxu0 0
      %489 = vmatprep.subr.bf16.mxu0 0
      %490 = vmatpush1.bf16.msra.mxu0 0
      %491 = vmatprep.subr.bf16.mxu0 0
      %492 = vmatpush1.bf16.msra.mxu0 0
      %493 = vmatprep.subr.bf16.mxu0 0
      %494 = vmatpush1.bf16.msra.mxu0 0
      %495 = vmatprep.subr.bf16.mxu0 0
      %496 = vmatpush1.bf16.msra.mxu0 0
      %497 = vmatprep.subr.bf16.mxu0 0
      %498 = vmatpush1.bf16.msra.mxu0 0
      %499 = vmatprep.subr.bf16.mxu0 0
      %500 = vmatpush1.bf16.msra.mxu0 0
      %501 = vmatprep.subr.bf16.mxu0 0
      %502 = vmatpush1.bf16.msra.mxu0 0
      %503 = vmatprep.subr.bf16.mxu0 0
      %504 = vmatpush1.bf16.msra.mxu0 0
      %505 = vmatprep.subr.bf16.mxu0 0
      %506 = vmatpush1.bf16.msra.mxu0 0
      %507 = vmatprep.subr.bf16.mxu0 0
      %508 = vmatpush1.bf16.msra.mxu0 0
      %509 = vmatprep.subr.bf16.mxu0 0
      %510 = vmatpush1.bf16.msra.mxu0 0
      %511 = vmatprep.subr.bf16.mxu0 0
      %512 = vmatpush1.bf16.msra.mxu0 0
      %513 = vmatprep.subr.bf16.mxu0 0
      %514 = vmatpush1.bf16.msra.mxu0 0
      %515 = vmatprep.mubr.bf16.mxu0 0
      %516 = vmatmul.mubr.bf16.gmra.mrb[0].mxu0 %v407
      %v517 = vpop.f32.mrb[0].mxu0
      %v518 = vadd.f32 %v453, %v517
      %v519 = vpop.f32.mrb[0].mxu0
      %v520 = vpop.f32.mrb[0].mxu0
      %v521 = vadd.f32 %v456, %v520
      %v522 = vpop.f32.mrb[0].mxu0
      %523 = vmatprep.mubr.bf16.mxu0 0
      %524 = vmatmul.mubr.bf16.gmra.mrb[0].mxu0 %v410
      %v525 = vpop.f32.mrb[0].mxu0
      %v526 = vadd.f32 %v461, %v525
      %v527 = vpop.f32.mrb[0].mxu0
      %v528 = vpop.f32.mrb[0].mxu0
      %v529 = vadd.f32 %v464, %v528
      %v530 = vpop.f32.mrb[0].mxu0
      %531 = vmatprep.mubr.bf16.mxu0 0
      %532 = vmatmul.mubr.bf16.gmra.mrb[0].mxu0 %v413
      %v533 = vpop.f32.mrb[0].mxu0
      %v534 = vadd.f32 %v469, %v533
      %v535 = vpop.f32.mrb[0].mxu0
      %v536 = vpop.f32.mrb[0].mxu0
      %v537 = vadd.f32 %v472, %v536
      %v538 = vpop.f32.mrb[0].mxu0
      %539 = vmatprep.mubr.bf16.mxu0 0
      %540 = vmatmul.mubr.bf16.gmra.mrb[0].mxu0 %v416
      %v541 = vpop.f32.mrb[0].mxu0
      %v542 = vadd.f32 %v477, %v541
      %v543 = vpop.f32.mrb[0].mxu0
      %v544 = vpop.f32.mrb[0].mxu0
      %v545 = vadd.f32 %v480, %v544
      %v546 = vpop.f32.mrb[0].mxu0
      %547 = vdwg.mxu0
      %v548 = vmax.f32 %v518, 0.0
      %v549 = vmax.f32 %v521, 0.0
      %v550 = vmax.f32 %v526, 0.0
      %v551 = vmax.f32 %v529, 0.0
      %v552 = vmax.f32 %v534, 0.0
      %v553 = vmax.f32 %v537, 0.0
      %v554 = vmax.f32 %v542, 0.0
      %v555 = vmax.f32 %v545, 0.0
      %v556 = vpack.c.bf16 %v549, %v548
      %v557 = vpack.c.bf16 %v551, %v550
      %v558 = vpack.c.bf16 %v553, %v552
      %v559 = vpack.c.bf16 %v555, %v554
      %v564 = vunpack.c.l.b16 %v556
      %v565 = vunpack.c.h.b16 %v556
      %v566 = vunpack.c.l.b16 %v557
      %v567 = vunpack.c.h.b16 %v557
      %v568 = vunpack.c.l.b16 %v558
      %v569 = vunpack.c.h.b16 %v558
      %v570 = vunpack.c.l.b16 %v559
      %v571 = vunpack.c.h.b16 %v559
      %v572 = vpack.c.b16 %v564, %v564
      %v573 = vpack.c.b16 %v565, %v565
      %v574 = vpack.c.b16 %v566, %v566
      %v575 = vpack.c.b16 %v567, %v567
      %v576 = vpack.c.b16 %v568, %v568
      %v577 = vpack.c.b16 %v569, %v569
      %v578 = vpack.c.b16 %v570, %v570
      %v579 = vpack.c.b16 %v571, %v571
      %vm588 = vcmask 257024
      %589 = vst.msk [vmem:[%s175] sm:$0xf] %vm588, %v572
      %590 = vst.msk [vmem:[%s175 + $0x4] sm:$0xf] %vm588, %v573
      %591 = vst.msk [vmem:[%s175 + $0x8] sm:$0xf] %vm588, %v574
      %592 = vst.msk [vmem:[%s175 + $0xc] sm:$0xf] %vm588, %v575
      %593 = vst.msk [vmem:[%s175 + $0x10] sm:$0xf] %vm588, %v576
      %594 = vst.msk [vmem:[%s175 + $0x14] sm:$0xf] %vm588, %v577
      %595 = vst.msk [vmem:[%s175 + $0x18] sm:$0xf] %vm588, %v578
      %596 = vst.msk [vmem:[%s175 + $0x1c] sm:$0xf] %vm588, %v579
      %s597 = smul.u32 8, %s14
      %p598 = scmp.lt.s32.totalorder %s597, 15
      %s599 = scalar_select %p598, %s597, 15
      %s600 = smul.addr %s599, 4
      %s601 = scalar_lea.vmem %s3, %s600
      // Predicated region
      $region33: #{tree_forward.9} parent=31 // pred_check
        %p602 = pneg %p100
      $region34: #{tree_forward.9} parent=31 // pred_check_branch
        %604 = sbr.rel (%p602) target = $region36
      $region35: #{tree_forward.9} parent=31 // pred_region
        %s605 = smul.u32 8, %s14
      $region36: #{tree_forward.9} parent=31 // pred_fallthru
        _
    $region32: #{tree_forward.9} parent=5 // pred_fallthru
      _
    %p606 = scmp.le.s32.totalorder 2, %s9
    // Predicated region
    $region37: #{tree_forward.9} parent=5 // pred_check
      %p607 = pneg %p606
    $region38: #{tree_forward.9} parent=5 // pred_check_branch
      %609 = sbr.rel (%p607) target = $region40
    $region39: #{tree_forward.9} parent=5 // pred_region
      %s610 = ssub.s32 %s9, 2
      // Predicated region
      $region41: #{tree_forward.9} parent=39 // pred_check
        %p611 = pneg %p106
      $region42: #{tree_forward.9} parent=39 // pred_check_branch
        %613 = sbr.rel (%p611) target = $region44
      $region43: #{tree_forward.9} parent=39 // pred_region
        %s614 = smul.u32 8, %s15
        %p615 = scmp.lt.s32.totalorder %s614, 15
        %s616 = scalar_select %p615, %s614, 15
        %s617 = smul.addr %s616, 4
        %s618 = scalar_lea.vmem %s3, %s617
      $region44: #{tree_forward.9} parent=39 // pred_fallthru
        _
    $region40: #{tree_forward.9} parent=5 // pred_fallthru
      _
  $region6: #{tree_forward.9} parent=0 // loop_footer
    %s13 = sadd.s32 1, %s9
  $region7: #{tree_forward.9} parent=0 // loop_footer_branch
    %8 = sbr.rel target = $region3
  $region8: #{tree_forward.9} parent=0 // loop_exit
    _

// kernel: tree_forward.11
$region0: #{tree_forward.11}
  #allocation0 [shape = 'u32[]', space=smem, size = 0x4, offset = 0x4, fixed_abs, tag = 'smem constant byte address 0x4 - core index']
  #allocation1 [shape = 'u32[144,128]{1,0:T(1,128)}', space=vmem, size = 0x12000, scoped, tag = 'internal scratch']
  %s0 = inlined_call_operand.vmem [shape: bf16[128,32], index: 0, kind: input, shape index: {}]
  %s1 = inlined_call_operand.vmem [shape: bf16[128,32], index: 1, kind: input, shape index: {}]
  %s2 = inlined_call_operand.vmem [shape: bf16[128,16], index: 2, kind: input, shape index: {}]
  %s3 = inlined_call_operand.vmem [shape: bf16[32,32], index: 3, kind: input, shape index: {}]
  %s4 = inlined_call_operand.vmem [shape: bf16[32,32], index: 4, kind: input, shape index: {}]
  %s5 = inlined_call_operand.vmem [shape: bf16[16,32], index: 5, kind: input, shape index: {}]
  %s6 = inlined_call_operand.vmem [shape: f32[1,32], index: 6, kind: input, shape index: {}]
  %s7 = inlined_call_operand.vmem [shape: bf16[128,32], index: 7, kind: output, shape index: {}]
  %s8 = sld [smem:[#allocation0]]
  $region61: #{tree_forward.11} parent=0
    _
  %s10 = ssub.s32 1, %s8
  %s11 = scalar_select 0, %s10, %s8
  loop: start=0, step=1, limit=4
  $region2: #{tree_forward.11} parent=0 // loop_pre_header
    _
  $region3: #{tree_forward.11} parent=0 // loop_header
    %s13 = sphi 0, %s17
    %p14 = scmp.ge.s32.totalorder %s13, 4
    %s23 = sphi 0, %s25
    %s26 = sphi 0, %s23
    %s27 = sphi 0, %s26
    %s43 = sphi 0, %s27
    %s49 = sphi 0, %s51
    %s52 = sphi 0, %s49
    %s53 = sphi 0, %s52
    %s69 = sphi 0, %s53
    %s75 = sphi 0, %s77
    %s78 = sphi 0, %s75
    %s79 = sphi 0, %s78
    %s95 = sphi 0, %s79
    %s99 = sphi 0, %s99
    %s101 = sphi 0, %s99
    %s102 = sphi 0, %s101
    %s116 = sphi 0, %s102
    %s120 = sphi 0, %s120
    %s122 = sphi 0, %s120
    %s123 = sphi 0, %s122
    %s137 = sphi 0, %s123
    %s141 = sphi 0, %s141
    %s143 = sphi 0, %s141
    %s144 = sphi 0, %s143
    %s158 = sphi 0, %s144
    %s162 = sphi 0, %s162
    %s164 = sphi 0, %s162
    %s165 = sphi 0, %s164
    %s179 = sphi 0, %s165
    %s185 = sphi 0, %s187
    %s188 = sphi 0, %s185
    %s189 = sphi 0, %s188
    %s205 = sphi 0, %s189
  $region4: #{tree_forward.11} parent=0 // loop_header_branch
    %16 = sbr.rel (%p14) target = $region8
  $region5: #{tree_forward.11} parent=0 // loop_body
    %s18 = ssub.s32 %s13, 1
    %s19 = ssub.s32 %s13, 2
    %s20 = sadd.s32 %s13, 1
    %s21 = ssub.s32 %s13, %s20
    %p22 = scmp.eq.s32.totalorder %s21, 0
    %s24 = sadd.s32 %s23, 1
    %s25 = scalar_select %p22, %s23, %s24
    %p28 = pneg %p22
    %p29 = scmp.eq.s32.totalorder %s13, 1
    %p30 = por %p28, %p29
    %p31 = scmp.ne.s32.totalorder %s23, %s26
    %p32 = scmp.eq.s32.totalorder %s13, 0
    %p33 = por %p31, %p32
    %p34 = scmp.ne.s32.totalorder %s23, %s26
    %p35 = scmp.eq.s32.totalorder %s18, 1
    %p36 = por %p34, %p35
    %p37 = scmp.ne.s32.totalorder %s26, %s27
    %p38 = scmp.eq.s32.totalorder %s18, 0
    %p39 = por %p37, %p38
    %p40 = scmp.ne.s32.totalorder %s26, %s27
    %p41 = scmp.eq.s32.totalorder %s19, 1
    %p42 = por %p40, %p41
    %p44 = scmp.ne.s32.totalorder %s27, %s43
    %p45 = scmp.eq.s32.totalorder %s19, 0
    %p46 = por %p44, %p45
    %s47 = ssub.s32 %s13, %s20
    %p48 = scmp.eq.s32.totalorder %s47, 0
    %s50 = sadd.s32 %s49, 1
    %s51 = scalar_select %p48, %s49, %s50
    %p54 = pneg %p48
    %p55 = scmp.eq.s32.totalorder %s13, 1
    %p56 = por %p54, %p55
    %p57 = scmp.ne.s32.totalorder %s49, %s52
    %p58 = scmp.eq.s32.totalorder %s13, 0
    %p59 = por %p57, %p58
    %p60 = scmp.ne.s32.totalorder %s49, %s52
    %p61 = scmp.eq.s32.totalorder %s18, 1
    %p62 = por %p60, %p61
    %p63 = scmp.ne.s32.totalorder %s52, %s53
    %p64 = scmp.eq.s32.totalorder %s18, 0
    %p65 = por %p63, %p64
    %p66 = scmp.ne.s32.totalorder %s52, %s53
    %p67 = scmp.eq.s32.totalorder %s19, 1
    %p68 = por %p66, %p67
    %p70 = scmp.ne.s32.totalorder %s53, %s69
    %p71 = scmp.eq.s32.totalorder %s19, 0
    %p72 = por %p70, %p71
    %s73 = ssub.s32 %s13, %s20
    %p74 = scmp.eq.s32.totalorder %s73, 0
    %s76 = sadd.s32 %s75, 1
    %s77 = scalar_select %p74, %s75, %s76
    %p80 = pneg %p74
    %p81 = scmp.eq.s32.totalorder %s13, 1
    %p82 = por %p80, %p81
    %p83 = scmp.ne.s32.totalorder %s75, %s78
    %p84 = scmp.eq.s32.totalorder %s13, 0
    %p85 = por %p83, %p84
    %p86 = scmp.ne.s32.totalorder %s75, %s78
    %p87 = scmp.eq.s32.totalorder %s18, 1
    %p88 = por %p86, %p87
    %p89 = scmp.ne.s32.totalorder %s78, %s79
    %p90 = scmp.eq.s32.totalorder %s18, 0
    %p91 = por %p89, %p90
    %p92 = scmp.ne.s32.totalorder %s78, %s79
    %p93 = scmp.eq.s32.totalorder %s19, 1
    %p94 = por %p92, %p93
    %p96 = scmp.ne.s32.totalorder %s79, %s95
    %p97 = scmp.eq.s32.totalorder %s19, 0
    %p98 = por %p96, %p97
    %s100 = sadd.s32 %s99, 1
    %p103 = scmp.eq.s32.totalorder %s13, 1
    %p104 = scmp.ne.s32.totalorder %s99, %s101
    %p105 = scmp.eq.s32.totalorder %s13, 0
    %p106 = por %p104, %p105
    %p107 = scmp.ne.s32.totalorder %s99, %s101
    %p108 = scmp.eq.s32.totalorder %s18, 1
    %p109 = por %p107, %p108
    %p110 = scmp.ne.s32.totalorder %s101, %s102
    %p111 = scmp.eq.s32.totalorder %s18, 0
    %p112 = por %p110, %p111
    %p113 = scmp.ne.s32.totalorder %s101, %s102
    %p114 = scmp.eq.s32.totalorder %s19, 1
    %p115 = por %p113, %p114
    %p117 = scmp.ne.s32.totalorder %s102, %s116
    %p118 = scmp.eq.s32.totalorder %s19, 0
    %p119 = por %p117, %p118
    %s121 = sadd.s32 %s120, 1
    %p124 = scmp.eq.s32.totalorder %s13, 1
    %p125 = scmp.ne.s32.totalorder %s120, %s122
    %p126 = scmp.eq.s32.totalorder %s13, 0
    %p127 = por %p125, %p126
    %p128 = scmp.ne.s32.totalorder %s120, %s122
    %p129 = scmp.eq.s32.totalorder %s18, 1
    %p130 = por %p128, %p129
    %p131 = scmp.ne.s32.totalorder %s122, %s123
    %p132 = scmp.eq.s32.totalorder %s18, 0
    %p133 = por %p131, %p132
    %p134 = scmp.ne.s32.totalorder %s122, %s123
    %p135 = scmp.eq.s32.totalorder %s19, 1
    %p136 = por %p134, %p135
    %p138 = scmp.ne.s32.totalorder %s123, %s137
    %p139 = scmp.eq.s32.totalorder %s19, 0
    %p140 = por %p138, %p139
    %s142 = sadd.s32 %s141, 1
    %p145 = scmp.eq.s32.totalorder %s13, 1
    %p146 = scmp.ne.s32.totalorder %s141, %s143
    %p147 = scmp.eq.s32.totalorder %s13, 0
    %p148 = por %p146, %p147
    %p149 = scmp.ne.s32.totalorder %s141, %s143
    %p150 = scmp.eq.s32.totalorder %s18, 1
    %p151 = por %p149, %p150
    %p152 = scmp.ne.s32.totalorder %s143, %s144
    %p153 = scmp.eq.s32.totalorder %s18, 0
    %p154 = por %p152, %p153
    %p155 = scmp.ne.s32.totalorder %s143, %s144
    %p156 = scmp.eq.s32.totalorder %s19, 1
    %p157 = por %p155, %p156
    %p159 = scmp.ne.s32.totalorder %s144, %s158
    %p160 = scmp.eq.s32.totalorder %s19, 0
    %p161 = por %p159, %p160
    %s163 = sadd.s32 %s162, 1
    %p166 = scmp.eq.s32.totalorder %s13, 1
    %p167 = scmp.ne.s32.totalorder %s162, %s164
    %p168 = scmp.eq.s32.totalorder %s13, 0
    %p169 = por %p167, %p168
    %p170 = scmp.ne.s32.totalorder %s162, %s164
    %p171 = scmp.eq.s32.totalorder %s18, 1
    %p172 = por %p170, %p171
    %p173 = scmp.ne.s32.totalorder %s164, %s165
    %p174 = scmp.eq.s32.totalorder %s18, 0
    %p175 = por %p173, %p174
    %p176 = scmp.ne.s32.totalorder %s164, %s165
    %p177 = scmp.eq.s32.totalorder %s19, 1
    %p178 = por %p176, %p177
    %p180 = scmp.ne.s32.totalorder %s165, %s179
    %p181 = scmp.eq.s32.totalorder %s19, 0
    %p182 = por %p180, %p181
    %s183 = ssub.s32 %s13, %s20
    %p184 = scmp.eq.s32.totalorder %s183, 0
    %s186 = sadd.s32 %s185, 1
    %s187 = scalar_select %p184, %s185, %s186
    %p190 = pneg %p184
    %p191 = scmp.eq.s32.totalorder %s13, 1
    %p192 = por %p190, %p191
    %p193 = scmp.ne.s32.totalorder %s185, %s188
    %p194 = scmp.eq.s32.totalorder %s13, 0
    %p195 = por %p193, %p194
    %p196 = scmp.ne.s32.totalorder %s185, %s188
    %p197 = scmp.eq.s32.totalorder %s18, 1
    %p198 = por %p196, %p197
    %p199 = scmp.ne.s32.totalorder %s188, %s189
    %p200 = scmp.eq.s32.totalorder %s18, 0
    %p201 = por %p199, %p200
    %p202 = scmp.ne.s32.totalorder %s188, %s189
    %p203 = scmp.eq.s32.totalorder %s19, 1
    %p204 = por %p202, %p203
    %p206 = scmp.ne.s32.totalorder %s189, %s205
    %p207 = scmp.eq.s32.totalorder %s19, 0
    %p208 = por %p206, %p207
    %p209 = scmp.le.s32.totalorder 1, %s13
    %p210 = scmp.lt.s32.totalorder %s13, 3
    %p211 = pnand %p209, %p210
    %p212 = pneg %p211
    // Predicated region
    $region9: #{tree_forward.11} parent=5 // pred_check
      _
    $region10: #{tree_forward.11} parent=5 // pred_check_branch
      %214 = sbr.rel (%p211) target = $region12
    $region11: #{tree_forward.11} parent=5 // pred_region
      %s215 = ssub.s32 %s13, 1
      // Predicated region
      $region13: #{tree_forward.11} parent=11 // pred_check
        %p216 = pneg %p112
      $region14: #{tree_forward.11} parent=11 // pred_check_branch
        %218 = sbr.rel (%p216) target = $region16
      $region15: #{tree_forward.11} parent=11 // pred_region
        _
      $region16: #{tree_forward.11} parent=11 // pred_fallthru
        _
      // Predicated region
      $region17: #{tree_forward.11} parent=11 // pred_check
        %p219 = pneg %p133
      $region18: #{tree_forward.11} parent=11 // pred_check_branch
        %221 = sbr.rel (%p219) target = $region20
      $region19: #{tree_forward.11} parent=11 // pred_region
        _
      $region20: #{tree_forward.11} parent=11 // pred_fallthru
        _
      // Predicated region
      $region21: #{tree_forward.11} parent=11 // pred_check
        %p222 = pneg %p154
      $region22: #{tree_forward.11} parent=11 // pred_check_branch
        %224 = sbr.rel (%p222) target = $region24
      $region23: #{tree_forward.11} parent=11 // pred_region
        _
      $region24: #{tree_forward.11} parent=11 // pred_fallthru
        _
      // Predicated region
      $region25: #{tree_forward.11} parent=11 // pred_check
        %p225 = pneg %p175
      $region26: #{tree_forward.11} parent=11 // pred_check_branch
        %227 = sbr.rel (%p225) target = $region28
      $region27: #{tree_forward.11} parent=11 // pred_region
        _
      $region28: #{tree_forward.11} parent=11 // pred_fallthru
        _
    $region12: #{tree_forward.11} parent=5 // pred_fallthru
      _
    %p228 = scmp.lt.s32.totalorder %s13, 2
    // Predicated region
    $region29: #{tree_forward.11} parent=5 // pred_check
      %p229 = pneg %p228
    $region30: #{tree_forward.11} parent=5 // pred_check_branch
      %231 = sbr.rel (%p229) target = $region32
    $region31: #{tree_forward.11} parent=5 // pred_region
      // Predicated region
      $region33: #{tree_forward.11} parent=31 // pred_check
        %p232 = pneg %p33
      $region34: #{tree_forward.11} parent=31 // pred_check_branch
        %234 = sbr.rel (%p232) target = $region36
      $region35: #{tree_forward.11} parent=31 // pred_region
        %s235 = smul.u32 8, %s13
        %p236 = scmp.lt.s32.totalorder %s235, 15
        %s237 = scalar_select %p236, %s235, 15
        %s238 = smul.addr %s237, 4
        %s239 = scalar_lea.vmem %s0, %s238
        %s240 = smul.u32 8, %s13
      $region36: #{tree_forward.11} parent=31 // pred_fallthru
        _
      // Predicated region
      $region37: #{tree_forward.11} parent=31 // pred_check
        %p241 = pneg %p59
      $region38: #{tree_forward.11} parent=31 // pred_check_branch
        %243 = sbr.rel (%p241) target = $region40
      $region39: #{tree_forward.11} parent=31 // pred_region
        %s244 = smul.u32 8, %s13
        %p245 = scmp.lt.s32.totalorder %s244, 15
        %s246 = scalar_select %p245, %s244, 15
        %s247 = smul.addr %s246, 4
        %s248 = scalar_lea.vmem %s1, %s247
        %s249 = smul.u32 8, %s13
      $region40: #{tree_forward.11} parent=31 // pred_fallthru
        _
      // Predicated region
      $region41: #{tree_forward.11} parent=31 // pred_check
        %p250 = pneg %p85
      $region42: #{tree_forward.11} parent=31 // pred_check_branch
        %252 = sbr.rel (%p250) target = $region44
      $region43: #{tree_forward.11} parent=31 // pred_region
        %s253 = smul.u32 8, %s13
        %p254 = scmp.lt.s32.totalorder %s253, 15
        %s255 = scalar_select %p254, %s253, 15
        %s256 = smul.addr %s255, 4
        %s257 = scalar_lea.vmem %s2, %s256
        %s258 = smul.u32 8, %s13
      $region44: #{tree_forward.11} parent=31 // pred_fallthru
        _
    $region32: #{tree_forward.11} parent=5 // pred_fallthru
      _
    %p259 = scmp.le.s32.totalorder 1, %s13
    %p260 = scmp.lt.s32.totalorder %s13, 3
    %p261 = pnand %p259, %p260
    %p262 = pneg %p261
    // Predicated region
    $region45: #{tree_forward.11} parent=5 // pred_check
      _
    $region46: #{tree_forward.11} parent=5 // pred_check_branch
      %264 = sbr.rel (%p261) target = $region48
    $region47: #{tree_forward.11} parent=5 // pred_region
      %s265 = ssub.s32 %s13, 1
      %s266 = smul.u32 8, %s18
      %p267 = scmp.lt.s32.totalorder %s266, 15
      %s268 = scalar_select %p267, %s266, 15
      %s269 = smul.addr %s268, 4
      %s270 = scalar_lea.vmem %s0, %s269
      %p271 = pneg %p39
      %p272 = pneg %p36
      %s273 = smul.u32 8, %s18
      %p274 = scmp.lt.s32.totalorder %s273, 15
      %s275 = scalar_select %p274, %s273, 15
      %s276 = smul.addr %s275, 4
      %s277 = scalar_lea.vmem %s1, %s276
      %p278 = pneg %p65
      %p279 = pneg %p62
      %s280 = smul.u32 8, %s18
      %p281 = scmp.lt.s32.totalorder %s280, 15
      %s282 = scalar_select %p281, %s280, 15
      %s283 = smul.addr %s282, 4
      %s284 = scalar_lea.vmem %s2, %s283
      %p285 = pneg %p91
      %p286 = pneg %p88
      %p287 = pneg %p112
      %p288 = pneg %p109
      %p289 = pneg %p133
      %p290 = pneg %p130
      %p291 = pneg %p154
      %p292 = pneg %p151
      %p293 = pneg %p175
      %p294 = pneg %p172
      %p295 = pneg %p201
      %p296 = pneg %p198
      %s297 = smul.u32 8, %s18
      %p298 = scmp.lt.s32.totalorder %s297, 15
      %s299 = scalar_select %p298, %s297, 15
      %s300 = smul.addr %s299, 4
      %s301 = scalar_lea.vmem %s7, %s300
      %s302 = smul.u32 8, %s18
      %p303 = scmp.lt.s32.totalorder %s302, 15
      %s304 = scalar_select %p303, %s302, 15
      %s305 = smul.addr %s304, 4
      %s306 = scalar_lea.vmem %s0, %s305
      %s307 = smul.u32 8, %s18
      %s308 = smul.u32 8, %s18
      %p309 = scmp.lt.s32.totalorder %s308, 15
      %s310 = scalar_select %p309, %s308, 15
      %s311 = smul.addr %s310, 4
      %s312 = scalar_lea.vmem %s1, %s311
      %s313 = smul.u32 8, %s18
      %s314 = smul.u32 8, %s18
      %p315 = scmp.lt.s32.totalorder %s314, 15
      %s316 = scalar_select %p315, %s314, 15
      %s317 = smul.addr %s316, 4
      %s318 = scalar_lea.vmem %s2, %s317
      %s319 = smul.u32 8, %s18
      %s320 = smul.u32 8, %s18
      %p321 = scmp.lt.s32.totalorder %s320, 15
      %s322 = scalar_select %p321, %s320, 15
      %s323 = smul.addr %s322, 4
      %s324 = scalar_lea.vmem %s7, %s323
      %s325 = smul.u32 8, %s18
      %v327 = vld [vmem:[%s306] sm:$0xf]
      %v328 = vld [vmem:[%s306 + $0x4] sm:$0xf]
      %v329 = vld [vmem:[%s306 + $0x8] sm:$0xf]
      %v330 = vld [vmem:[%s306 + $0xc] sm:$0xf]
      %v331 = vld [vmem:[%s306 + $0x10] sm:$0xf]
      %v332 = vld [vmem:[%s306 + $0x14] sm:$0xf]
      %v333 = vld [vmem:[%s306 + $0x18] sm:$0xf]
      %v334 = vld [vmem:[%s306 + $0x1c] sm:$0xf]
      %v335 = vld [vmem:[%s3] sm:$0xf]
      %v336 = vld [vmem:[%s3 + $0x4] sm:$0xf]
      %v337 = vld [vmem:[%s3 + $0x8] sm:$0xf]
      %v338 = vld [vmem:[%s3 + $0xc] sm:$0xf]
      %v339 = vld [vmem:[%s312] sm:$0xf]
      %v340 = vld [vmem:[%s312 + $0x4] sm:$0xf]
      %v341 = vld [vmem:[%s312 + $0x8] sm:$0xf]
      %v342 = vld [vmem:[%s312 + $0xc] sm:$0xf]
      %v343 = vld [vmem:[%s312 + $0x10] sm:$0xf]
      %v344 = vld [vmem:[%s312 + $0x14] sm:$0xf]
      %v345 = vld [vmem:[%s312 + $0x18] sm:$0xf]
      %v346 = vld [vmem:[%s312 + $0x1c] sm:$0xf]
      %v347 = vld [vmem:[%s4] sm:$0xf]
      %v348 = vld [vmem:[%s4 + $0x4] sm:$0xf]
      %v349 = vld [vmem:[%s4 + $0x8] sm:$0xf]
      %v350 = vld [vmem:[%s4 + $0xc] sm:$0xf]
      %v359 = vunpack.c.l.b16 %v339
      %v360 = vunpack.c.l.b16 %v340
      %v361 = vunpack.c.l.b16 %v341
      %v362 = vunpack.c.l.b16 %v342
      %v363 = vunpack.c.l.b16 %v343
      %v364 = vunpack.c.l.b16 %v344
      %v365 = vunpack.c.l.b16 %v345
      %v366 = vunpack.c.l.b16 %v346
      %v367 = vpack.c.b16 %v360, %v359
      %v368 = vpack.c.b16 %v362, %v361
      %v369 = vpack.c.b16 %v364, %v363
      %v370 = vpack.c.b16 %v366, %v365
      %v375 = vunpack.c.l.b16 %v347
      %v376 = vunpack.c.l.b16 %v348
      %v377 = vunpack.c.l.b16 %v349
      %v378 = vunpack.c.l.b16 %v350
      %v379 = vpack.c.b16 %v376, %v375
      %v380 = vpack.c.b16 %v378, %v377
      %vm383 = vcmask 261120
      %v385 = vsel %vm383, %v367, 0
      %v388 = vsel %vm383, %v368, 0
      %v391 = vsel %vm383, %v369, 0
      %v394 = vsel %vm383, %v370, 0
      %396 = vmatprep.subr.bf16.mxu0 0
      %397 = vmatpush1.bf16.msra.mxu0 %v379
      %398 = vmatprep.subr.bf16.mxu0 0
      %399 = vmatpush1.bf16.msra.mxu0 %v380
      %400 = vmatprep.subr.bf16.mxu0 0
      %401 = vmatpush1.bf16.msra.mxu0 0
      %402 = vmatprep.subr.bf16.mxu0 0
      %403 = vmatpush1.bf16.msra.mxu0 0
      %404 = vmatprep.subr.bf16.mxu0 0
      %405 = vmatpush1.bf16.msra.mxu0 0
      %406 = vmatprep.subr.bf16.mxu0 0
      %407 = vmatpush1.bf16.msra.mxu0 0
      %408 = vmatprep.subr.bf16.mxu0 0
      %409 = vmatpush1.bf16.msra.mxu0 0
      %410 = vmatprep.subr.bf16.mxu0 0
      %411 = vmatpush1.bf16.msra.mxu0 0
      %412 = vmatprep.subr.bf16.mxu0 0
      %413 = vmatpush1.bf16.msra.mxu0 0
      %414 = vmatprep.subr.bf16.mxu0 0
      %415 = vmatpush1.bf16.msra.mxu0 0
      %416 = vmatprep.subr.bf16.mxu0 0
      %417 = vmatpush1.bf16.msra.mxu0 0
      %418 = vmatprep.subr.bf16.mxu0 0
      %419 = vmatpush1.bf16.msra.mxu0 0
      %420 = vmatprep.subr.bf16.mxu0 0
      %421 = vmatpush1.bf16.msra.mxu0 0
      %422 = vmatprep.subr.bf16.mxu0 0
      %423 = vmatpush1.bf16.msra.mxu0 0
      %424 = vmatprep.subr.bf16.mxu0 0
      %425 = vmatpush1.bf16.msra.mxu0 0
      %426 = vmatprep.subr.bf16.mxu0 0
      %427 = vmatpush1.bf16.msra.mxu0 0
      %428 = vmatprep.mubr.bf16.mxu0 0
      %429 = vmatmul.mubr.bf16.gmra.mrb[0].mxu0 %v385
      %v430 = vpop.f32.mrb[0].mxu0
      %v431 = vadd.f32 0.0, %v430
      %v432 = vpop.f32.mrb[0].mxu0
      %v433 = vpop.f32.mrb[0].mxu0
      %v434 = vadd.f32 0.0, %v433
      %v435 = vpop.f32.mrb[0].mxu0
      %436 = vmatprep.mubr.bf16.mxu0 0
      %437 = vmatmul.mubr.bf16.gmra.mrb[0].mxu0 %v388
      %v438 = vpop.f32.mrb[0].mxu0
      %v439 = vadd.f32 0.0, %v438
      %v440 = vpop.f32.mrb[0].mxu0
      %v441 = vpop.f32.mrb[0].mxu0
      %v442 = vadd.f32 0.0, %v441
      %v443 = vpop.f32.mrb[0].mxu0
      %444 = vmatprep.mubr.bf16.mxu0 0
      %445 = vmatmul.mubr.bf16.gmra.mrb[0].mxu0 %v391
      %v446 = vpop.f32.mrb[0].mxu0
      %v447 = vadd.f32 0.0, %v446
      %v448 = vpop.f32.mrb[0].mxu0
      %v449 = vpop.f32.mrb[0].mxu0
      %v450 = vadd.f32 0.0, %v449
      %v451 = vpop.f32.mrb[0].mxu0
      %452 = vmatprep.mubr.bf16.mxu0 0
      %453 = vmatmul.mubr.bf16.gmra.mrb[0].mxu0 %v394
      %v454 = vpop.f32.mrb[0].mxu0
      %v455 = vadd.f32 0.0, %v454
      %v456 = vpop.f32.mrb[0].mxu0
      %v457 = vpop.f32.mrb[0].mxu0
      %v458 = vadd.f32 0.0, %v457
      %v459 = vpop.f32.mrb[0].mxu0
      %460 = vdwg.mxu0
      %v469 = vunpack.c.l.b16 %v327
      %v470 = vunpack.c.l.b16 %v328
      %v471 = vunpack.c.l.b16 %v329
      %v472 = vunpack.c.l.b16 %v330
      %v473 = vunpack.c.l.b16 %v331
      %v474 = vunpack.c.l.b16 %v332
      %v475 = vunpack.c.l.b16 %v333
      %v476 = vunpack.c.l.b16 %v334
      %v477 = vpack.c.b16 %v470, %v469
      %v478 = vpack.c.b16 %v472, %v471
      %v479 = vpack.c.b16 %v474, %v473
      %v480 = vpack.c.b16 %v476, %v475
      %v485 = vunpack.c.l.b16 %v335
      %v486 = vunpack.c.l.b16 %v336
      %v487 = vunpack.c.l.b16 %v337
      %v488 = vunpack.c.l.b16 %v338
      %v489 = vpack.c.b16 %v486, %v485
      %v490 = vpack.c.b16 %v488, %v487
      %v494 = vsel %vm383, %v477, 0
      %v497 = vsel %vm383, %v478, 0
      %v500 = vsel %vm383, %v479, 0
      %v503 = vsel %vm383, %v480, 0
      %505 = vmatprep.subr.bf16.mxu0 0
      %506 = vmatpush1.bf16.msra.mxu0 %v489
      %507 = vmatprep.subr.bf16.mxu0 0
      %508 = vmatpush1.bf16.msra.mxu0 %v490
      %509 = vmatprep.subr.bf16.mxu0 0
      %510 = vmatpush1.bf16.msra.mxu0 0
      %511 = vmatprep.subr.bf16.mxu0 0
      %512 = vmatpush1.bf16.msra.mxu0 0
      %513 = vmatprep.subr.bf16.mxu0 0
      %514 = vmatpush1.bf16.msra.mxu0 0
      %515 = vmatprep.subr.bf16.mxu0 0
      %516 = vmatpush1.bf16.msra.mxu0 0
      %517 = vmatprep.subr.bf16.mxu0 0
      %518 = vmatpush1.bf16.msra.mxu0 0
      %519 = vmatprep.subr.bf16.mxu0 0
      %520 = vmatpush1.bf16.msra.mxu0 0
      %521 = vmatprep.subr.bf16.mxu0 0
      %522 = vmatpush1.bf16.msra.mxu0 0
      %523 = vmatprep.subr.bf16.mxu0 0
      %524 = vmatpush1.bf16.msra.mxu0 0
      %525 = vmatprep.subr.bf16.mxu0 0
      %526 = vmatpush1.bf16.msra.mxu0 0
      %527 = vmatprep.subr.bf16.mxu0 0
      %528 = vmatpush1.bf16.msra.mxu0 0
      %529 = vmatprep.subr.bf16.mxu0 0
      %530 = vmatpush1.bf16.msra.mxu0 0
      %531 = vmatprep.subr.bf16.mxu0 0
      %532 = vmatpush1.bf16.msra.mxu0 0
      %533 = vmatprep.subr.bf16.mxu0 0
      %534 = vmatpush1.bf16.msra.mxu0 0
      %535 = vmatprep.subr.bf16.mxu0 0
      %536 = vmatpush1.bf16.msra.mxu0 0
      %537 = vmatprep.mubr.bf16.mxu0 0
      %538 = vmatmul.mubr.bf16.gmra.mrb[0].mxu0 %v494
      %v539 = vpop.f32.mrb[0].mxu0
      %v540 = vadd.f32 %v431, %v539
      %v541 = vpop.f32.mrb[0].mxu0
      %v542 = vpop.f32.mrb[0].mxu0
      %v543 = vadd.f32 %v434, %v542
      %v544 = vpop.f32.mrb[0].mxu0
      %545 = vmatprep.mubr.bf16.mxu0 0
      %546 = vmatmul.mubr.bf16.gmra.mrb[0].mxu0 %v497
      %v547 = vpop.f32.mrb[0].mxu0
      %v548 = vadd.f32 %v439, %v547
      %v549 = vpop.f32.mrb[0].mxu0
      %v550 = vpop.f32.mrb[0].mxu0
      %v551 = vadd.f32 %v442, %v550
      %v552 = vpop.f32.mrb[0].mxu0
      %553 = vmatprep.mubr.bf16.mxu0 0
      %554 = vmatmul.mubr.bf16.gmra.mrb[0].mxu0 %v500
      %v555 = vpop.f32.mrb[0].mxu0
      %v556 = vadd.f32 %v447, %v555
      %v557 = vpop.f32.mrb[0].mxu0
      %v558 = vpop.f32.mrb[0].mxu0
      %v559 = vadd.f32 %v450, %v558
      %v560 = vpop.f32.mrb[0].mxu0
      %561 = vmatprep.mubr.bf16.mxu0 0
      %562 = vmatmul.mubr.bf16.gmra.mrb[0].mxu0 %v503
      %v563 = vpop.f32.mrb[0].mxu0
      %v564 = vadd.f32 %v455, %v563
      %v565 = vpop.f32.mrb[0].mxu0
      %v566 = vpop.f32.mrb[0].mxu0
      %v567 = vadd.f32 %v458, %v566
      %v568 = vpop.f32.mrb[0].mxu0
      %569 = vdwg.mxu0
      %v570 = vld [vmem:[%s318] sm:$0xf]
      %v571 = vld [vmem:[%s318 + $0x4] sm:$0xf]
      %v572 = vld [vmem:[%s318 + $0x8] sm:$0xf]
      %v573 = vld [vmem:[%s318 + $0xc] sm:$0xf]
      %v574 = vld [vmem:[%s318 + $0x10] sm:$0xf]
      %v575 = vld [vmem:[%s318 + $0x14] sm:$0xf]
      %v576 = vld [vmem:[%s318 + $0x18] sm:$0xf]
      %v577 = vld [vmem:[%s318 + $0x1c] sm:$0xf]
      %v578 = vld [vmem:[%s5] sm:$0xf]
      %v579 = vld [vmem:[%s5 + $0x4] sm:$0xf]
      %v588 = vunpack.c.l.b16 %v570
      %v589 = vunpack.c.l.b16 %v571
      %v590 = vunpack.c.l.b16 %v572
      %v591 = vunpack.c.l.b16 %v573
      %v592 = vunpack.c.l.b16 %v574
      %v593 = vunpack.c.l.b16 %v575
      %v594 = vunpack.c.l.b16 %v576
      %v595 = vunpack.c.l.b16 %v577
      %v596 = vpack.c.b16 %v589, %v588
      %v597 = vpack.c.b16 %v591, %v590
      %v598 = vpack.c.b16 %v593, %v592
      %v599 = vpack.c.b16 %v595, %v594
      %v602 = vunpack.c.l.b16 %v578
      %v603 = vunpack.c.l.b16 %v579
      %v604 = vpack.c.b16 %v603, %v602
      %vm606 = vcmask 130048
      %v608 = vsel %vm606, %v596, 0
      %v611 = vsel %vm606, %v597, 0
      %v614 = vsel %vm606, %v598, 0
      %v617 = vsel %vm606, %v599, 0
      %619 = vmatprep.subr.bf16.mxu0 0
      %620 = vmatpush1.bf16.msra.mxu0 %v604
      %621 = vmatprep.subr.bf16.mxu0 0
      %622 = vmatpush1.bf16.msra.mxu0 0
      %623 = vmatprep.subr.bf16.mxu0 0
      %624 = vmatpush1.bf16.msra.mxu0 0
      %625 = vmatprep.subr.bf16.mxu0 0
      %626 = vmatpush1.bf16.msra.mxu0 0
      %627 = vmatprep.subr.bf16.mxu0 0
      %628 = vmatpush1.bf16.msra.mxu0 0
      %629 = vmatprep.subr.bf16.mxu0 0
      %630 = vmatpush1.bf16.msra.mxu0 0
      %631 = vmatprep.subr.bf16.mxu0 0
      %632 = vmatpush1.bf16.msra.mxu0 0
      %633 = vmatprep.subr.bf16.mxu0 0
      %634 = vmatpush1.bf16.msra.mxu0 0
      %635 = vmatprep.subr.bf16.mxu0 0
      %636 = vmatpush1.bf16.msra.mxu0 0
      %637 = vmatprep.subr.bf16.mxu0 0
      %638 = vmatpush1.bf16.msra.mxu0 0
      %639 = vmatprep.subr.bf16.mxu0 0
      %640 = vmatpush1.bf16.msra.mxu0 0
      %641 = vmatprep.subr.bf16.mxu0 0
      %642 = vmatpush1.bf16.msra.mxu0 0
      %643 = vmatprep.subr.bf16.mxu0 0
      %644 = vmatpush1.bf16.msra.mxu0 0
      %645 = vmatprep.subr.bf16.mxu0 0
      %646 = vmatpush1.bf16.msra.mxu0 0
      %647 = vmatprep.subr.bf16.mxu0 0
      %648 = vmatpush1.bf16.msra.mxu0 0
      %649 = vmatprep.subr.bf16.mxu0 0
      %650 = vmatpush1.bf16.msra.mxu0 0
      %651 = vmatprep.mubr.bf16.mxu0 0
      %652 = vmatmul.mubr.bf16.gmra.mrb[0].mxu0 %v608
      %v653 = vpop.f32.mrb[0].mxu0
      %v654 = vadd.f32 0.0, %v653
      %v655 = vpop.f32.mrb[0].mxu0
      %v656 = vpop.f32.mrb[0].mxu0
      %v657 = vadd.f32 0.0, %v656
      %v658 = vpop.f32.mrb[0].mxu0
      %659 = vmatprep.mubr.bf16.mxu0 0
      %660 = vmatmul.mubr.bf16.gmra.mrb[0].mxu0 %v611
      %v661 = vpop.f32.mrb[0].mxu0
      %v662 = vadd.f32 0.0, %v661
      %v663 = vpop.f32.mrb[0].mxu0
      %v664 = vpop.f32.mrb[0].mxu0
      %v665 = vadd.f32 0.0, %v664
      %v666 = vpop.f32.mrb[0].mxu0
      %667 = vmatprep.mubr.bf16.mxu0 0
      %668 = vmatmul.mubr.bf16.gmra.mrb[0].mxu0 %v614
      %v669 = vpop.f32.mrb[0].mxu0
      %v670 = vadd.f32 0.0, %v669
      %v671 = vpop.f32.mrb[0].mxu0
      %v672 = vpop.f32.mrb[0].mxu0
      %v673 = vadd.f32 0.0, %v672
      %v674 = vpop.f32.mrb[0].mxu0
      %675 = vmatprep.mubr.bf16.mxu0 0
      %676 = vmatmul.mubr.bf16.gmra.mrb[0].mxu0 %v617
      %v677 = vpop.f32.mrb[0].mxu0
      %v678 = vadd.f32 0.0, %v677
      %v679 = vpop.f32.mrb[0].mxu0
      %v680 = vpop.f32.mrb[0].mxu0
      %v681 = vadd.f32 0.0, %v680
      %v682 = vpop.f32.mrb[0].mxu0
      %683 = vdwg.mxu0
      %v684 = vadd.f32 %v540, %v654
      %v685 = vadd.f32 %v543, %v657
      %v686 = vadd.f32 %v548, %v662
      %v687 = vadd.f32 %v551, %v665
      %v688 = vadd.f32 %v556, %v670
      %v689 = vadd.f32 %v559, %v673
      %v690 = vadd.f32 %v564, %v678
      %v691 = vadd.f32 %v567, %v681
      %v692 = vld [vmem:[%s6] sm:$0x1]
      %v694 = vlaneseq
      %v695 = vshrl.u32 %v694, 7
      %v696 = vsub.s32 0, %v695
      %v697 = vrot.slane %v692, %v696
      %v699 = vadd.f32 %v684, %v697
      %v700 = vadd.f32 %v685, %v697
      %v701 = vadd.f32 %v686, %v697
      %v702 = vadd.f32 %v687, %v697
      %v703 = vadd.f32 %v688, %v697
      %v704 = vadd.f32 %v689, %v697
      %v705 = vadd.f32 %v690, %v697
      %v706 = vadd.f32 %v691, %v697
      %v707 = vmax.f32 %v699, 0.0
      %v708 = vmax.f32 %v700, 0.0
      %v709 = vmax.f32 %v701, 0.0
      %v710 = vmax.f32 %v702, 0.0
      %v711 = vmax.f32 %v703, 0.0
      %v712 = vmax.f32 %v704, 0.0
      %v713 = vmax.f32 %v705, 0.0
      %v714 = vmax.f32 %v706, 0.0
      %v715 = vpack.c.bf16 %v708, %v707
      %v716 = vpack.c.bf16 %v710, %v709
      %v717 = vpack.c.bf16 %v712, %v711
      %v718 = vpack.c.bf16 %v714, %v713
      %v723 = vunpack.c.l.b16 %v715
      %v724 = vunpack.c.h.b16 %v715
      %v725 = vunpack.c.l.b16 %v716
      %v726 = vunpack.c.h.b16 %v716
      %v727 = vunpack.c.l.b16 %v717
      %v728 = vunpack.c.h.b16 %v717
      %v729 = vunpack.c.l.b16 %v718
      %v730 = vunpack.c.h.b16 %v718
      %v731 = vpack.c.b16 %v723, %v723
      %v732 = vpack.c.b16 %v724, %v724
      %v733 = vpack.c.b16 %v725, %v725
      %v734 = vpack.c.b16 %v726, %v726
      %v735 = vpack.c.b16 %v727, %v727
      %v736 = vpack.c.b16 %v728, %v728
      %v737 = vpack.c.b16 %v729, %v729
      %v738 = vpack.c.b16 %v730, %v730
      %vm747 = vcmask 257024
      %748 = vst.msk [vmem:[%s324] sm:$0xf] %vm747, %v731
      %749 = vst.msk [vmem:[%s324 + $0x4] sm:$0xf] %vm747, %v732
      %750 = vst.msk [vmem:[%s324 + $0x8] sm:$0xf] %vm747, %v733
      %751 = vst.msk [vmem:[%s324 + $0xc] sm:$0xf] %vm747, %v734
      %752 = vst.msk [vmem:[%s324 + $0x10] sm:$0xf] %vm747, %v735
      %753 = vst.msk [vmem:[%s324 + $0x14] sm:$0xf] %vm747, %v736
      %754 = vst.msk [vmem:[%s324 + $0x18] sm:$0xf] %vm747, %v737
      %755 = vst.msk [vmem:[%s324 + $0x1c] sm:$0xf] %vm747, %v738
      %s756 = smul.u32 8, %s18
      %p757 = scmp.lt.s32.totalorder %s756, 15
      %s758 = scalar_select %p757, %s756, 15
      %s759 = smul.addr %s758, 4
      %s760 = scalar_lea.vmem %s7, %s759
      // Predicated region
      $region49: #{tree_forward.11} parent=47 // pred_check
        %p761 = pneg %p198
      $region50: #{tree_forward.11} parent=47 // pred_check_branch
        %763 = sbr.rel (%p761) target = $region52
      $region51: #{tree_forward.11} parent=47 // pred_region
        %s764 = smul.u32 8, %s18
      $region52: #{tree_forward.11} parent=47 // pred_fallthru
        _
    $region48: #{tree_forward.11} parent=5 // pred_fallthru
      _
    %p765 = scmp.le.s32.totalorder 2, %s13
    // Predicated region
    $region53: #{tree_forward.11} parent=5 // pred_check
      %p766 = pneg %p765
    $region54: #{tree_forward.11} parent=5 // pred_check_branch
      %768 = sbr.rel (%p766) target = $region56
    $region55: #{tree_forward.11} parent=5 // pred_region
      %s769 = ssub.s32 %s13, 2
      // Predicated region
      $region57: #{tree_forward.11} parent=55 // pred_check
        %p770 = pneg %p204
      $region58: #{tree_forward.11} parent=55 // pred_check_branch
        %772 = sbr.rel (%p770) target = $region60
      $region59: #{tree_forward.11} parent=55 // pred_region
        %s773 = smul.u32 8, %s19
        %p774 = scmp.lt.s32.totalorder %s773, 15
        %s775 = scalar_select %p774, %s773, 15
        %s776 = smul.addr %s775, 4
        %s777 = scalar_lea.vmem %s7, %s776
      $region60: #{tree_forward.11} parent=55 // pred_fallthru
        _
    $region56: #{tree_forward.11} parent=5 // pred_fallthru
      _
  $region6: #{tree_forward.11} parent=0 // loop_footer
    %s17 = sadd.s32 1, %s13
  $region7: #{tree_forward.11} parent=0 // loop_footer_branch
    %12 = sbr.rel target = $region3
  $region8: #{tree_forward.11} parent=0 // loop_exit
    _

</llo_original>
